<compile_context>
chip_gen: v5e
topology: v5e:2x2
jax: 0.10.0
libtpu: 0.0.40
codegen_flags: <defaults>
</compile_context>

<pallas_src>
import functools

import jax
import jax.numpy as jnp
from jax import lax
from jax.experimental import pallas as pl
from jax.experimental.pallas import tpu as pltpu


# ---------------------------------------------------------------------------
# Pallas kernel: whole decoder forward in one invocation (grid=(1,)).
# ---------------------------------------------------------------------------
def _decoder_kernel(
    x_ref,        # (Bp, D)      distinct input rows (batch padded to 8), f32
    perm_ref,     # (S*Bp, Bp)   one-hot row permutation (time-major), f32
    wih1_ref,     # (D, 4D)      layer-1 input weights (pre-transposed), f32
    whh1_ref,     # (D, 4D)      layer-1 hidden weights (pre-transposed), mxu dtype
    b1_ref,       # (1, 4D)      b_ih1 + b_hh1, f32
    wih2_ref,     # (D, 4H)      layer-2 input weights (pre-transposed), mxu dtype
    whh2_ref,     # (H, 4H)      layer-2 hidden weights (pre-transposed), mxu dtype
    b2_ref,       # (1, 4H)      b_ih2 + b_hh2, f32
    wout_ref,     # (2D, nf)     f32
    bout_ref,     # (1, nf)      f32
    o_ref,        # (S*Bp, nf)   time-major flattened output
    xproj_ref,    # scratch (S*Bp, 4D)  precomputed layer-1 input projections (f32)
    hs_ref,       # scratch (S*Bp, 2D)  per-timestep layer-2 hidden states (f32)
):
    Bp, D = x_ref.shape
    H = hs_ref.shape[1]               # 2*D
    S = hs_ref.shape[0] // Bp

    # ---- Layer-1 input projection for every (t, b), computed once (f32). ----
    # x has only B distinct rows -> project once, then expand with the exact one-hot
    # permutation (pure 0/1 row selection, kept in f32).  Combined bias folded in.
    xp = jnp.dot(x_ref[...], wih1_ref[...], preferred_element_type=jnp.float32)
    xproj_ref[...] = (
        jnp.dot(perm_ref[...], xp, preferred_element_type=jnp.float32)
        + b1_ref[...]
    )

    # Hoisted bias broadcast for layer 2 (JAX does not CSE broadcast_in_dim).
    b2b = jnp.broadcast_to(b2_ref[...], (Bp, 4 * H))

    def step(t, carry):
        h1, c1, h2, c2 = carry
        r0 = pl.multiple_of(t * Bp, Bp)

        # ----- LSTM layer 1 (hidden = D); x-projection precomputed -----
        whh1 = whh1_ref[...]
        g1 = xproj_ref[pl.ds(r0, Bp), :] + jnp.dot(
            h1.astype(whh1.dtype), whh1, preferred_element_type=jnp.float32)
        # Full-width nonlinearities (2 EUP pushes), slice the RESULTS.
        s1 = 0.5 * jnp.tanh(0.5 * g1) + 0.5          # == sigmoid(g1)
        t1 = jnp.tanh(g1)
        i1 = s1[:, 0 * D:1 * D]
        f1 = s1[:, 1 * D:2 * D]
        gg1 = t1[:, 2 * D:3 * D]
        o1 = s1[:, 3 * D:4 * D]
        c1 = f1 * c1 + i1 * gg1
        h1 = o1 * jnp.tanh(c1)

        # ----- LSTM layer 2 (hidden = H = 2D); split gate dots (no concat) -----
        wih2 = wih2_ref[...]
        whh2 = whh2_ref[...]
        g2 = (jnp.dot(h1.astype(wih2.dtype), wih2,
                      preferred_element_type=jnp.float32)
              + jnp.dot(h2.astype(whh2.dtype), whh2,
                        preferred_element_type=jnp.float32)
              + b2b)
        s2 = 0.5 * jnp.tanh(0.5 * g2) + 0.5          # == sigmoid(g2)
        t2 = jnp.tanh(g2)
        i2 = s2[:, 0 * H:1 * H]
        f2 = s2[:, 1 * H:2 * H]
        gg2 = t2[:, 2 * H:3 * H]
        o2 = s2[:, 3 * H:4 * H]
        c2 = f2 * c2 + i2 * gg2
        h2 = o2 * jnp.tanh(c2)

        # stash layer-2 hidden state; output Linear is done once after the loop
        hs_ref[pl.ds(r0, Bp), :] = h2
        return h1, c1, h2, c2

    init = (
        jnp.zeros((Bp, D), jnp.float32), jnp.zeros((Bp, D), jnp.float32),
        jnp.zeros((Bp, H), jnp.float32), jnp.zeros((Bp, H), jnp.float32),
    )
    # Full unroll for short sequences; capped unroll keeps code size sane at large S.
    lax.fori_loop(0, S, step, init, unroll=min(S, 8))

    # ----- Output Linear: one matmul + one store for all timesteps -----
    out = jnp.dot(hs_ref[...], wout_ref[...],
                  preferred_element_type=jnp.float32) + bout_ref[...]
    o_ref[...] = out.astype(o_ref.dtype)


# ---------------------------------------------------------------------------
# Wrapper: parameter packing + pallas_call
# ---------------------------------------------------------------------------
def _pack_params(raw, mxu_dtype):
    D = raw["whh1"].shape[1]
    H = raw["whh2"].shape[1]
    return {
        # One-time projection + output: keep f32 (off the recurrence critical path).
        "wih1": raw["wih1"].T.astype(jnp.float32),                 # (D, 4D)
        "wout": raw["wout"].T.astype(jnp.float32),                 # (H, nf)
        "bout": raw["bout"].reshape(1, -1).astype(jnp.float32),
        # Per-step recurrence dots: MXU operand dtype (bf16 by default).
        "whh1": raw["whh1"].T.astype(mxu_dtype),                   # (D, 4D)
        "wih2": raw["wih2"].T.astype(mxu_dtype),                   # (D, 4H)
        "whh2": raw["whh2"].T.astype(mxu_dtype),                   # (H, 4H)
        # Combined biases stay f32 (elementwise math is f32).
        "b1": (raw["bih1"] + raw["bhh1"]).reshape(1, 4 * D).astype(jnp.float32),
        "b2": (raw["bih2"] + raw["bhh2"]).reshape(1, 4 * H).astype(jnp.float32),
    }


def decoder_forward(x, raw_params, *, seq_len, mxu_dtype=jnp.bfloat16):
    """x: (B, input_dim) f32 -> (B, seq_len, n_features) f32 (== Decoder.forward)."""
    B, D = x.shape
    H = 2 * D
    nf = raw_params["wout"].shape[0]
    S = int(seq_len)
    Bp = ((B + 7) // 8) * 8                     # pad batch to a sublane multiple

    p = _pack_params(raw_params, mxu_dtype)

    x_pad = jnp.zeros((Bp, D), jnp.float32).at[:B].set(x.astype(jnp.float32))

    # One-hot permutation implementing x.repeat(S, 1).reshape(B, S, D) in
    # time-major order: row (t*Bp + b) selects x[(b*S + t) % B].  Kept f32 so the
    # row selection is exact even when recurrence dots run in bf16.
    t_idx = jnp.arange(S, dtype=jnp.int32)[:, None]       # (S, 1)
    b_idx = jnp.arange(Bp, dtype=jnp.int32)[None, :]      # (1, Bp)
    src = (b_idx * S + t_idx) % B                         # (S, Bp)
    perm = jax.nn.one_hot(src.reshape(S * Bp), Bp, dtype=jnp.float32)

    full = lambda a: pl.BlockSpec(a.shape, lambda i: (0,) * a.ndim)

    out2d = pl.pallas_call(
        _decoder_kernel,
        out_shape=jax.ShapeDtypeStruct((S * Bp, nf), jnp.float32),
        grid_spec=pltpu.PrefetchScalarGridSpec(
            num_scalar_prefetch=0,
            grid=(1,),                       # whole recurrence in one invocation
            in_specs=[
                full(x_pad), full(perm),
                full(p["wih1"]), full(p["whh1"]), full(p["b1"]),
                full(p["wih2"]), full(p["whh2"]), full(p["b2"]),
                full(p["wout"]), full(p["bout"]),
            ],
            out_specs=pl.BlockSpec((S * Bp, nf), lambda i: (0, 0)),
            scratch_shapes=[
                pltpu.VMEM((S * Bp, 4 * D), jnp.float32),   # xproj
                pltpu.VMEM((S * Bp, H), jnp.float32),       # h2 history
            ],
        ),
        compiler_params=pltpu.CompilerParams(
            dimension_semantics=("arbitrary",),       # serial recurrence
            vmem_limit_bytes=32 * 1024 * 1024,        # explicit budget (v7x-safe)
        ),
    )(x_pad, perm, p["wih1"], p["whh1"], p["b1"], p["wih2"], p["whh2"], p["b2"],
      p["wout"], p["bout"])

    # (S*Bp, nf) time-major -> (B, S, nf) batch-first, strip batch padding.
    out = out2d.reshape(S, Bp, nf)[:, :B, :]
    return jnp.transpose(out, (1, 0, 2))


# ---------------------------------------------------------------------------
# Deterministic parameter init (PyTorch layouts: weight_ih (4h,in), weight_hh (4h,h))
# ---------------------------------------------------------------------------
def init_params(key, input_dim, n_features):
    D = input_dim
    H = 2 * D
    ks = jax.random.split(key, 10)

    def u(k, shape, bound):
        return jax.random.uniform(k, shape, jnp.float32, -bound, bound)

    k1 = 1.0 / float(D) ** 0.5
    k2 = 1.0 / float(H) ** 0.5
    return {
        "wih1": u(ks[0], (4 * D, D), k1), "whh1": u(ks[1], (4 * D, D), k1),
        "bih1": u(ks[2], (4 * D,), k1),   "bhh1": u(ks[3], (4 * D,), k1),
        "wih2": u(ks[4], (4 * H, D), k2), "whh2": u(ks[5], (4 * H, H), k2),
        "bih2": u(ks[6], (4 * H,), k2),   "bhh2": u(ks[7], (4 * H,), k2),
        "wout": u(ks[8], (n_features, H), k2), "bout": u(ks[9], (n_features,), k2),
    }


# ---------------------------------------------------------------------------
# Pure-JAX reference (PyTorch semantics), f32-accurate matmuls for a tight check
# ---------------------------------------------------------------------------
_HI = lax.Precision.HIGHEST


def _lstm_ref(x_seq, wih, whh, bih, bhh):
    B = x_seq.shape[0]
    Hh = whh.shape[1]

    def stepf(carry, x_t):
        h, c = carry
        g = (jnp.dot(x_t, wih.T, precision=_HI)
             + jnp.dot(h, whh.T, precision=_HI) + bih + bhh)
        i, f, gg, o = jnp.split(g, 4, axis=-1)
        c = jax.nn.sigmoid(f) * c + jax.nn.sigmoid(i) * jnp.tanh(gg)
        h = jax.nn.sigmoid(o) * jnp.tanh(c)
        return (h, c), h

    init = (jnp.zeros((B, Hh), jnp.float32), jnp.zeros((B, Hh), jnp.float32))
    _, hs = lax.scan(stepf, init, jnp.swapaxes(x_seq, 0, 1))
    return jnp.swapaxes(hs, 0, 1)


def decoder_reference(x, raw, *, seq_len):
    B, D = x.shape
    x_rep = jnp.tile(x, (seq_len, 1)).reshape(B, seq_len, D)
    h1 = _lstm_ref(x_rep, raw["wih1"], raw["whh1"], raw["bih1"], raw["bhh1"])
    h2 = _lstm_ref(h1, raw["wih2"], raw["whh2"], raw["bih2"], raw["bhh2"])
    return jnp.dot(h2, raw["wout"].T, precision=_HI) + raw["bout"]


# ---------------------------------------------------------------------------
if __name__ == "__main__":
    B, D, S, NF = 4, 32, 8, 1          # batch, input_dim, seq_len, n_features

    key = jax.random.PRNGKey(0)
    k_x, k_p = jax.random.split(key)
    x = jax.random.normal(k_x, (B, D), jnp.float32)
    params = init_params(k_p, D, NF)

    ref = decoder_reference(x, params, seq_len=S)

    # f32 MXU-operand path: tight correctness check against PyTorch semantics.
    fwd_f32 = jax.jit(functools.partial(decoder_forward, seq_len=S,
                                        mxu_dtype=jnp.float32))
    out_f32 = jax.block_until_ready(fwd_f32(x, params))
    assert out_f32.shape == (B, S, NF), out_f32.shape
    err_f32 = float(jnp.max(jnp.abs(out_f32 - ref)))
    assert jnp.allclose(out_f32, ref, atol=1e-4, rtol=1e-3), err_f32

    # bf16 MXU-operand path (performance default): relaxed tolerance.
    fwd_bf16 = jax.jit(functools.partial(decoder_forward, seq_len=S,
                                         mxu_dtype=jnp.bfloat16))
    out_bf16 = jax.block_until_ready(fwd_bf16(x, params))
    assert out_bf16.shape == (B, S, NF), out_bf16.shape
    err_bf16 = float(jnp.max(jnp.abs(out_bf16 - ref)))
    assert jnp.allclose(out_bf16, ref, atol=5e-2, rtol=5e-2), err_bf16

    print("KERNEL_OK")
</pallas_src>

<mosaic_0001>
module attributes {stable_mosaic.version = 11 : i64} {
  func.func @_decoder_kernel(%arg0: i32, %arg1: memref<8x32xf32, #tpu.memory_space<vmem>>, %arg2: memref<64x8xf32, #tpu.memory_space<vmem>>, %arg3: memref<32x128xf32, #tpu.memory_space<vmem>>, %arg4: memref<32x128xf32, #tpu.memory_space<vmem>>, %arg5: memref<1x128xf32, #tpu.memory_space<vmem>>, %arg6: memref<32x256xf32, #tpu.memory_space<vmem>>, %arg7: memref<64x256xf32, #tpu.memory_space<vmem>>, %arg8: memref<1x256xf32, #tpu.memory_space<vmem>>, %arg9: memref<64x1xf32, #tpu.memory_space<vmem>>, %arg10: memref<1x1xf32, #tpu.memory_space<vmem>>, %arg11: memref<64x1xf32, #tpu.memory_space<vmem>>, %arg12: memref<64x128xf32, #tpu.memory_space<vmem>>, %arg13: memref<64x64xf32, #tpu.memory_space<vmem>>) attributes {dimension_semantics = [#tpu.dimension_semantics<arbitrary>], iteration_bounds = array<i64: 1>, scalar_prefetch = 0 : i64, scratch_operands = 2 : i64, tpu.core_type = #tpu.core_type<tc>, window_params = [{pipeline_mode = #tpu.pipeline_mode<synchronous>, transform_indices = @transform_0, window_bounds = array<i64: 8, 32>}, {pipeline_mode = #tpu.pipeline_mode<synchronous>, transform_indices = @transform_1, window_bounds = array<i64: 64, 8>}, {pipeline_mode = #tpu.pipeline_mode<synchronous>, transform_indices = @transform_2, window_bounds = array<i64: 32, 128>}, {pipeline_mode = #tpu.pipeline_mode<synchronous>, transform_indices = @transform_3, window_bounds = array<i64: 32, 128>}, {pipeline_mode = #tpu.pipeline_mode<synchronous>, transform_indices = @transform_4, window_bounds = array<i64: 1, 128>}, {pipeline_mode = #tpu.pipeline_mode<synchronous>, transform_indices = @transform_5, window_bounds = array<i64: 32, 256>}, {pipeline_mode = #tpu.pipeline_mode<synchronous>, transform_indices = @transform_6, window_bounds = array<i64: 64, 256>}, {pipeline_mode = #tpu.pipeline_mode<synchronous>, transform_indices = @transform_7, window_bounds = array<i64: 1, 256>}, {pipeline_mode = #tpu.pipeline_mode<synchronous>, transform_indices = @transform_8, window_bounds = array<i64: 64, 1>}, {pipeline_mode = #tpu.pipeline_mode<synchronous>, transform_indices = @transform_9, window_bounds = array<i64: 1, 1>}, {pipeline_mode = #tpu.pipeline_mode<synchronous>, transform_indices = @transform_10, window_bounds = array<i64: 64, 1>}]} {
    %c0 = arith.constant 0 : index
    %c0_0 = arith.constant 0 : index
    %0 = vector.load %arg1[%c0, %c0_0] : memref<8x32xf32, #tpu.memory_space<vmem>>, vector<8x32xf32>
    %c0_1 = arith.constant 0 : index
    %c0_2 = arith.constant 0 : index
    %1 = vector.load %arg3[%c0_1, %c0_2] : memref<32x128xf32, #tpu.memory_space<vmem>>, vector<32x128xf32>
    %cst = arith.constant dense<0.000000e+00> : vector<8x128xf32>
    %2 = tpu.matmul %0, %1, %cst {dimension_numbers = #tpu.dot_dimension_numbers<[1], [0], [0], [1], [0, 0, 1, 1], [], []>} : vector<8x32xf32>, vector<32x128xf32>, vector<8x128xf32> -> vector<8x128xf32>
    %c0_3 = arith.constant 0 : index
    %c0_4 = arith.constant 0 : index
    %3 = vector.load %arg2[%c0_3, %c0_4] : memref<64x8xf32, #tpu.memory_space<vmem>>, vector<64x8xf32>
    %cst_5 = arith.constant dense<0.000000e+00> : vector<64x128xf32>
    %4 = tpu.matmul %3, %2, %cst_5 {dimension_numbers = #tpu.dot_dimension_numbers<[1], [0], [0], [1], [0, 0, 1, 1], [], []>} : vector<64x8xf32>, vector<8x128xf32>, vector<64x128xf32> -> vector<64x128xf32>
    %c0_6 = arith.constant 0 : index
    %c0_7 = arith.constant 0 : index
    %5 = vector.load %arg5[%c0_6, %c0_7] : memref<1x128xf32, #tpu.memory_space<vmem>>, vector<1x128xf32>
    %6 = vector.broadcast %5 : vector<1x128xf32> to vector<64x128xf32>
    %7 = arith.addf %4, %6 : vector<64x128xf32>
    %c0_8 = arith.constant 0 : index
    %c0_9 = arith.constant 0 : index
    %8 = vector.load %arg12[%c0_8, %c0_9] : memref<64x128xf32, #tpu.memory_space<vmem>>, vector<64x128xf32>
    tpu.vector_store %arg12[%c0_8, %c0_9], %7 {strides = array<i32>} : memref<64x128xf32, #tpu.memory_space<vmem>>, vector<64x128xf32>,
    %c0_10 = arith.constant 0 : index
    %c0_11 = arith.constant 0 : index
    %9 = vector.load %arg8[%c0_10, %c0_11] : memref<1x256xf32, #tpu.memory_space<vmem>>, vector<1x256xf32>
    %10 = vector.shape_cast %9 : vector<1x256xf32> to vector<1x256xf32>
    %11 = vector.broadcast %10 : vector<1x256xf32> to vector<8x256xf32>
    %cst_12 = arith.constant 0.000000e+00 : f32
    %12 = vector.broadcast %cst_12 : f32 to vector<8x32xf32>
    %cst_13 = arith.constant 0.000000e+00 : f32
    %13 = vector.broadcast %cst_13 : f32 to vector<8x32xf32>
    %cst_14 = arith.constant 0.000000e+00 : f32
    %14 = vector.broadcast %cst_14 : f32 to vector<8x64xf32>
    %cst_15 = arith.constant 0.000000e+00 : f32
    %15 = vector.broadcast %cst_15 : f32 to vector<8x64xf32>
    %c0_i32 = arith.constant 0 : i32
    %c8_i32 = arith.constant 8 : i32
    %16 = arith.muli %c0_i32, %c8_i32 : i32
    %17 = tpu.assume_multiple %16, 8 : i32
    %c0_16 = arith.constant 0 : index
    %c0_17 = arith.constant 0 : index
    %18 = vector.load %arg4[%c0_16, %c0_17] : memref<32x128xf32, #tpu.memory_space<vmem>>, vector<32x128xf32>
    %19 = arith.index_cast %17 : i32 to index
    %c0_18 = arith.constant 0 : index
    %20 = vector.load %arg12[%19, %c0_18] : memref<64x128xf32, #tpu.memory_space<vmem>>, vector<8x128xf32>
    %cst_19 = arith.constant dense<0.000000e+00> : vector<8x128xf32>
    %21 = tpu.matmul %12, %18, %cst_19 {dimension_numbers = #tpu.dot_dimension_numbers<[1], [0], [0], [1], [0, 0, 1, 1], [], []>} : vector<8x32xf32>, vector<32x128xf32>, vector<8x128xf32> -> vector<8x128xf32>
    %22 = arith.addf %20, %21 : vector<8x128xf32>
    %cst_20 = arith.constant 5.000000e-01 : f32
    %23 = vector.broadcast %cst_20 : f32 to vector<8x128xf32>
    %24 = arith.mulf %23, %22 : vector<8x128xf32>
    %25 = math.tanh %24 : vector<8x128xf32>
    %cst_21 = arith.constant 5.000000e-01 : f32
    %26 = vector.broadcast %cst_21 : f32 to vector<8x128xf32>
    %27 = arith.mulf %26, %25 : vector<8x128xf32>
    %cst_22 = arith.constant 5.000000e-01 : f32
    %28 = vector.broadcast %cst_22 : f32 to vector<8x128xf32>
    %29 = arith.addf %27, %28 : vector<8x128xf32>
    %30 = math.tanh %22 : vector<8x128xf32>
    %31 = vector.extract_strided_slice %29 {offsets = [0, 0], sizes = [8, 32], strides = [1, 1]} : vector<8x128xf32> to vector<8x32xf32>
    %32 = vector.extract_strided_slice %29 {offsets = [0, 32], sizes = [8, 32], strides = [1, 1]} : vector<8x128xf32> to vector<8x32xf32>
    %33 = vector.extract_strided_slice %30 {offsets = [0, 64], sizes = [8, 32], strides = [1, 1]} : vector<8x128xf32> to vector<8x32xf32>
    %34 = vector.extract_strided_slice %29 {offsets = [0, 96], sizes = [8, 32], strides = [1, 1]} : vector<8x128xf32> to vector<8x32xf32>
    %35 = arith.mulf %32, %13 : vector<8x32xf32>
    %36 = arith.mulf %31, %33 : vector<8x32xf32>
    %37 = arith.addf %35, %36 : vector<8x32xf32>
    %38 = math.tanh %37 : vector<8x32xf32>
    %39 = arith.mulf %34, %38 : vector<8x32xf32>
    %c0_23 = arith.constant 0 : index
    %c0_24 = arith.constant 0 : index
    %40 = vector.load %arg6[%c0_23, %c0_24] : memref<32x256xf32, #tpu.memory_space<vmem>>, vector<32x256xf32>
    %c0_25 = arith.constant 0 : index
    %c0_26 = arith.constant 0 : index
    %41 = vector.load %arg7[%c0_25, %c0_26] : memref<64x256xf32, #tpu.memory_space<vmem>>, vector<64x256xf32>
    %cst_27 = arith.constant dense<0.000000e+00> : vector<8x256xf32>
    %42 = tpu.matmul %39, %40, %cst_27 {dimension_numbers = #tpu.dot_dimension_numbers<[1], [0], [0], [1], [0, 0, 1, 1], [], []>} : vector<8x32xf32>, vector<32x256xf32>, vector<8x256xf32> -> vector<8x256xf32>
    %cst_28 = arith.constant dense<0.000000e+00> : vector<8x256xf32>
    %43 = tpu.matmul %14, %41, %cst_28 {dimension_numbers = #tpu.dot_dimension_numbers<[1], [0], [0], [1], [0, 0, 1, 1], [], []>} : vector<8x64xf32>, vector<64x256xf32>, vector<8x256xf32> -> vector<8x256xf32>
    %44 = arith.addf %42, %43 : vector<8x256xf32>
    %45 = arith.addf %44, %11 : vector<8x256xf32>
    %cst_29 = arith.constant 5.000000e-01 : f32
    %46 = vector.broadcast %cst_29 : f32 to vector<8x256xf32>
    %47 = arith.mulf %46, %45 : vector<8x256xf32>
    %48 = math.tanh %47 : vector<8x256xf32>
    %cst_30 = arith.constant 5.000000e-01 : f32
    %49 = vector.broadcast %cst_30 : f32 to vector<8x256xf32>
    %50 = arith.mulf %49, %48 : vector<8x256xf32>
    %cst_31 = arith.constant 5.000000e-01 : f32
    %51 = vector.broadcast %cst_31 : f32 to vector<8x256xf32>
    %52 = arith.addf %50, %51 : vector<8x256xf32>
    %53 = math.tanh %45 : vector<8x256xf32>
    %54 = vector.extract_strided_slice %52 {offsets = [0, 0], sizes = [8, 64], strides = [1, 1]} : vector<8x256xf32> to vector<8x64xf32>
    %55 = vector.extract_strided_slice %52 {offsets = [0, 64], sizes = [8, 64], strides = [1, 1]} : vector<8x256xf32> to vector<8x64xf32>
    %56 = vector.extract_strided_slice %53 {offsets = [0, 128], sizes = [8, 64], strides = [1, 1]} : vector<8x256xf32> to vector<8x64xf32>
    %57 = vector.extract_strided_slice %52 {offsets = [0, 192], sizes = [8, 64], strides = [1, 1]} : vector<8x256xf32> to vector<8x64xf32>
    %58 = arith.mulf %55, %15 : vector<8x64xf32>
    %59 = arith.mulf %54, %56 : vector<8x64xf32>
    %60 = arith.addf %58, %59 : vector<8x64xf32>
    %61 = math.tanh %60 : vector<8x64xf32>
    %62 = arith.mulf %57, %61 : vector<8x64xf32>
    %63 = arith.index_cast %17 : i32 to index
    %c0_32 = arith.constant 0 : index
    %64 = vector.load %arg13[%63, %c0_32] : memref<64x64xf32, #tpu.memory_space<vmem>>, vector<8x64xf32>
    tpu.vector_store %arg13[%63, %c0_32], %62 {strides = array<i32>} : memref<64x64xf32, #tpu.memory_space<vmem>>, vector<8x64xf32>,
    %c1_i32 = arith.constant 1 : i32
    %c8_i32_33 = arith.constant 8 : i32
    %65 = arith.muli %c1_i32, %c8_i32_33 : i32
    %66 = tpu.assume_multiple %65, 8 : i32
    %c0_34 = arith.constant 0 : index
    %c0_35 = arith.constant 0 : index
    %67 = vector.load %arg4[%c0_34, %c0_35] : memref<32x128xf32, #tpu.memory_space<vmem>>, vector<32x128xf32>
    %68 = arith.index_cast %66 : i32 to index
    %c0_36 = arith.constant 0 : index
    %69 = vector.load %arg12[%68, %c0_36] : memref<64x128xf32, #tpu.memory_space<vmem>>, vector<8x128xf32>
    %cst_37 = arith.constant dense<0.000000e+00> : vector<8x128xf32>
    %70 = tpu.matmul %39, %67, %cst_37 {dimension_numbers = #tpu.dot_dimension_numbers<[1], [0], [0], [1], [0, 0, 1, 1], [], []>} : vector<8x32xf32>, vector<32x128xf32>, vector<8x128xf32> -> vector<8x128xf32>
    %71 = arith.addf %69, %70 : vector<8x128xf32>
    %cst_38 = arith.constant 5.000000e-01 : f32
    %72 = vector.broadcast %cst_38 : f32 to vector<8x128xf32>
    %73 = arith.mulf %72, %71 : vector<8x128xf32>
    %74 = math.tanh %73 : vector<8x128xf32>
    %cst_39 = arith.constant 5.000000e-01 : f32
    %75 = vector.broadcast %cst_39 : f32 to vector<8x128xf32>
    %76 = arith.mulf %75, %74 : vector<8x128xf32>
    %cst_40 = arith.constant 5.000000e-01 : f32
    %77 = vector.broadcast %cst_40 : f32 to vector<8x128xf32>
    %78 = arith.addf %76, %77 : vector<8x128xf32>
    %79 = math.tanh %71 : vector<8x128xf32>
    %80 = vector.extract_strided_slice %78 {offsets = [0, 0], sizes = [8, 32], strides = [1, 1]} : vector<8x128xf32> to vector<8x32xf32>
    %81 = vector.extract_strided_slice %78 {offsets = [0, 32], sizes = [8, 32], strides = [1, 1]} : vector<8x128xf32> to vector<8x32xf32>
    %82 = vector.extract_strided_slice %79 {offsets = [0, 64], sizes = [8, 32], strides = [1, 1]} : vector<8x128xf32> to vector<8x32xf32>
    %83 = vector.extract_strided_slice %78 {offsets = [0, 96], sizes = [8, 32], strides = [1, 1]} : vector<8x128xf32> to vector<8x32xf32>
    %84 = arith.mulf %81, %37 : vector<8x32xf32>
    %85 = arith.mulf %80, %82 : vector<8x32xf32>
    %86 = arith.addf %84, %85 : vector<8x32xf32>
    %87 = math.tanh %86 : vector<8x32xf32>
    %88 = arith.mulf %83, %87 : vector<8x32xf32>
    %c0_41 = arith.constant 0 : index
    %c0_42 = arith.constant 0 : index
    %89 = vector.load %arg6[%c0_41, %c0_42] : memref<32x256xf32, #tpu.memory_space<vmem>>, vector<32x256xf32>
    %c0_43 = arith.constant 0 : index
    %c0_44 = arith.constant 0 : index
    %90 = vector.load %arg7[%c0_43, %c0_44] : memref<64x256xf32, #tpu.memory_space<vmem>>, vector<64x256xf32>
    %cst_45 = arith.constant dense<0.000000e+00> : vector<8x256xf32>
    %91 = tpu.matmul %88, %89, %cst_45 {dimension_numbers = #tpu.dot_dimension_numbers<[1], [0], [0], [1], [0, 0, 1, 1], [], []>} : vector<8x32xf32>, vector<32x256xf32>, vector<8x256xf32> -> vector<8x256xf32>
    %cst_46 = arith.constant dense<0.000000e+00> : vector<8x256xf32>
    %92 = tpu.matmul %62, %90, %cst_46 {dimension_numbers = #tpu.dot_dimension_numbers<[1], [0], [0], [1], [0, 0, 1, 1], [], []>} : vector<8x64xf32>, vector<64x256xf32>, vector<8x256xf32> -> vector<8x256xf32>
    %93 = arith.addf %91, %92 : vector<8x256xf32>
    %94 = arith.addf %93, %11 : vector<8x256xf32>
    %cst_47 = arith.constant 5.000000e-01 : f32
    %95 = vector.broadcast %cst_47 : f32 to vector<8x256xf32>
    %96 = arith.mulf %95, %94 : vector<8x256xf32>
    %97 = math.tanh %96 : vector<8x256xf32>
    %cst_48 = arith.constant 5.000000e-01 : f32
    %98 = vector.broadcast %cst_48 : f32 to vector<8x256xf32>
    %99 = arith.mulf %98, %97 : vector<8x256xf32>
    %cst_49 = arith.constant 5.000000e-01 : f32
    %100 = vector.broadcast %cst_49 : f32 to vector<8x256xf32>
    %101 = arith.addf %99, %100 : vector<8x256xf32>
    %102 = math.tanh %94 : vector<8x256xf32>
    %103 = vector.extract_strided_slice %101 {offsets = [0, 0], sizes = [8, 64], strides = [1, 1]} : vector<8x256xf32> to vector<8x64xf32>
    %104 = vector.extract_strided_slice %101 {offsets = [0, 64], sizes = [8, 64], strides = [1, 1]} : vector<8x256xf32> to vector<8x64xf32>
    %105 = vector.extract_strided_slice %102 {offsets = [0, 128], sizes = [8, 64], strides = [1, 1]} : vector<8x256xf32> to vector<8x64xf32>
    %106 = vector.extract_strided_slice %101 {offsets = [0, 192], sizes = [8, 64], strides = [1, 1]} : vector<8x256xf32> to vector<8x64xf32>
    %107 = arith.mulf %104, %60 : vector<8x64xf32>
    %108 = arith.mulf %103, %105 : vector<8x64xf32>
    %109 = arith.addf %107, %108 : vector<8x64xf32>
    %110 = math.tanh %109 : vector<8x64xf32>
    %111 = arith.mulf %106, %110 : vector<8x64xf32>
    %112 = arith.index_cast %66 : i32 to index
    %c0_50 = arith.constant 0 : index
    %113 = vector.load %arg13[%112, %c0_50] : memref<64x64xf32, #tpu.memory_space<vmem>>, vector<8x64xf32>
    tpu.vector_store %arg13[%112, %c0_50], %111 {strides = array<i32>} : memref<64x64xf32, #tpu.memory_space<vmem>>, vector<8x64xf32>,
    %c2_i32 = arith.constant 2 : i32
    %c8_i32_51 = arith.constant 8 : i32
    %114 = arith.muli %c2_i32, %c8_i32_51 : i32
    %115 = tpu.assume_multiple %114, 8 : i32
    %c0_52 = arith.constant 0 : index
    %c0_53 = arith.constant 0 : index
    %116 = vector.load %arg4[%c0_52, %c0_53] : memref<32x128xf32, #tpu.memory_space<vmem>>, vector<32x128xf32>
    %117 = arith.index_cast %115 : i32 to index
    %c0_54 = arith.constant 0 : index
    %118 = vector.load %arg12[%117, %c0_54] : memref<64x128xf32, #tpu.memory_space<vmem>>, vector<8x128xf32>
    %cst_55 = arith.constant dense<0.000000e+00> : vector<8x128xf32>
    %119 = tpu.matmul %88, %116, %cst_55 {dimension_numbers = #tpu.dot_dimension_numbers<[1], [0], [0], [1], [0, 0, 1, 1], [], []>} : vector<8x32xf32>, vector<32x128xf32>, vector<8x128xf32> -> vector<8x128xf32>
    %120 = arith.addf %118, %119 : vector<8x128xf32>
    %cst_56 = arith.constant 5.000000e-01 : f32
    %121 = vector.broadcast %cst_56 : f32 to vector<8x128xf32>
    %122 = arith.mulf %121, %120 : vector<8x128xf32>
    %123 = math.tanh %122 : vector<8x128xf32>
    %cst_57 = arith.constant 5.000000e-01 : f32
    %124 = vector.broadcast %cst_57 : f32 to vector<8x128xf32>
    %125 = arith.mulf %124, %123 : vector<8x128xf32>
    %cst_58 = arith.constant 5.000000e-01 : f32
    %126 = vector.broadcast %cst_58 : f32 to vector<8x128xf32>
    %127 = arith.addf %125, %126 : vector<8x128xf32>
    %128 = math.tanh %120 : vector<8x128xf32>
    %129 = vector.extract_strided_slice %127 {offsets = [0, 0], sizes = [8, 32], strides = [1, 1]} : vector<8x128xf32> to vector<8x32xf32>
    %130 = vector.extract_strided_slice %127 {offsets = [0, 32], sizes = [8, 32], strides = [1, 1]} : vector<8x128xf32> to vector<8x32xf32>
    %131 = vector.extract_strided_slice %128 {offsets = [0, 64], sizes = [8, 32], strides = [1, 1]} : vector<8x128xf32> to vector<8x32xf32>
    %132 = vector.extract_strided_slice %127 {offsets = [0, 96], sizes = [8, 32], strides = [1, 1]} : vector<8x128xf32> to vector<8x32xf32>
    %133 = arith.mulf %130, %86 : vector<8x32xf32>
    %134 = arith.mulf %129, %131 : vector<8x32xf32>
    %135 = arith.addf %133, %134 : vector<8x32xf32>
    %136 = math.tanh %135 : vector<8x32xf32>
    %137 = arith.mulf %132, %136 : vector<8x32xf32>
    %c0_59 = arith.constant 0 : index
    %c0_60 = arith.constant 0 : index
    %138 = vector.load %arg6[%c0_59, %c0_60] : memref<32x256xf32, #tpu.memory_space<vmem>>, vector<32x256xf32>
    %c0_61 = arith.constant 0 : index
    %c0_62 = arith.constant 0 : index
    %139 = vector.load %arg7[%c0_61, %c0_62] : memref<64x256xf32, #tpu.memory_space<vmem>>, vector<64x256xf32>
    %cst_63 = arith.constant dense<0.000000e+00> : vector<8x256xf32>
    %140 = tpu.matmul %137, %138, %cst_63 {dimension_numbers = #tpu.dot_dimension_numbers<[1], [0], [0], [1], [0, 0, 1, 1], [], []>} : vector<8x32xf32>, vector<32x256xf32>, vector<8x256xf32> -> vector<8x256xf32>
    %cst_64 = arith.constant dense<0.000000e+00> : vector<8x256xf32>
    %141 = tpu.matmul %111, %139, %cst_64 {dimension_numbers = #tpu.dot_dimension_numbers<[1], [0], [0], [1], [0, 0, 1, 1], [], []>} : vector<8x64xf32>, vector<64x256xf32>, vector<8x256xf32> -> vector<8x256xf32>
    %142 = arith.addf %140, %141 : vector<8x256xf32>
    %143 = arith.addf %142, %11 : vector<8x256xf32>
    %cst_65 = arith.constant 5.000000e-01 : f32
    %144 = vector.broadcast %cst_65 : f32 to vector<8x256xf32>
    %145 = arith.mulf %144, %143 : vector<8x256xf32>
    %146 = math.tanh %145 : vector<8x256xf32>
    %cst_66 = arith.constant 5.000000e-01 : f32
    %147 = vector.broadcast %cst_66 : f32 to vector<8x256xf32>
    %148 = arith.mulf %147, %146 : vector<8x256xf32>
    %cst_67 = arith.constant 5.000000e-01 : f32
    %149 = vector.broadcast %cst_67 : f32 to vector<8x256xf32>
    %150 = arith.addf %148, %149 : vector<8x256xf32>
    %151 = math.tanh %143 : vector<8x256xf32>
    %152 = vector.extract_strided_slice %150 {offsets = [0, 0], sizes = [8, 64], strides = [1, 1]} : vector<8x256xf32> to vector<8x64xf32>
    %153 = vector.extract_strided_slice %150 {offsets = [0, 64], sizes = [8, 64], strides = [1, 1]} : vector<8x256xf32> to vector<8x64xf32>
    %154 = vector.extract_strided_slice %151 {offsets = [0, 128], sizes = [8, 64], strides = [1, 1]} : vector<8x256xf32> to vector<8x64xf32>
    %155 = vector.extract_strided_slice %150 {offsets = [0, 192], sizes = [8, 64], strides = [1, 1]} : vector<8x256xf32> to vector<8x64xf32>
    %156 = arith.mulf %153, %109 : vector<8x64xf32>
    %157 = arith.mulf %152, %154 : vector<8x64xf32>
    %158 = arith.addf %156, %157 : vector<8x64xf32>
    %159 = math.tanh %158 : vector<8x64xf32>
    %160 = arith.mulf %155, %159 : vector<8x64xf32>
    %161 = arith.index_cast %115 : i32 to index
    %c0_68 = arith.constant 0 : index
    %162 = vector.load %arg13[%161, %c0_68] : memref<64x64xf32, #tpu.memory_space<vmem>>, vector<8x64xf32>
    tpu.vector_store %arg13[%161, %c0_68], %160 {strides = array<i32>} : memref<64x64xf32, #tpu.memory_space<vmem>>, vector<8x64xf32>,
    %c3_i32 = arith.constant 3 : i32
    %c8_i32_69 = arith.constant 8 : i32
    %163 = arith.muli %c3_i32, %c8_i32_69 : i32
    %164 = tpu.assume_multiple %163, 8 : i32
    %c0_70 = arith.constant 0 : index
    %c0_71 = arith.constant 0 : index
    %165 = vector.load %arg4[%c0_70, %c0_71] : memref<32x128xf32, #tpu.memory_space<vmem>>, vector<32x128xf32>
    %166 = arith.index_cast %164 : i32 to index
    %c0_72 = arith.constant 0 : index
    %167 = vector.load %arg12[%166, %c0_72] : memref<64x128xf32, #tpu.memory_space<vmem>>, vector<8x128xf32>
    %cst_73 = arith.constant dense<0.000000e+00> : vector<8x128xf32>
    %168 = tpu.matmul %137, %165, %cst_73 {dimension_numbers = #tpu.dot_dimension_numbers<[1], [0], [0], [1], [0, 0, 1, 1], [], []>} : vector<8x32xf32>, vector<32x128xf32>, vector<8x128xf32> -> vector<8x128xf32>
    %169 = arith.addf %167, %168 : vector<8x128xf32>
    %cst_74 = arith.constant 5.000000e-01 : f32
    %170 = vector.broadcast %cst_74 : f32 to vector<8x128xf32>
    %171 = arith.mulf %170, %169 : vector<8x128xf32>
    %172 = math.tanh %171 : vector<8x128xf32>
    %cst_75 = arith.constant 5.000000e-01 : f32
    %173 = vector.broadcast %cst_75 : f32 to vector<8x128xf32>
    %174 = arith.mulf %173, %172 : vector<8x128xf32>
    %cst_76 = arith.constant 5.000000e-01 : f32
    %175 = vector.broadcast %cst_76 : f32 to vector<8x128xf32>
    %176 = arith.addf %174, %175 : vector<8x128xf32>
    %177 = math.tanh %169 : vector<8x128xf32>
    %178 = vector.extract_strided_slice %176 {offsets = [0, 0], sizes = [8, 32], strides = [1, 1]} : vector<8x128xf32> to vector<8x32xf32>
    %179 = vector.extract_strided_slice %176 {offsets = [0, 32], sizes = [8, 32], strides = [1, 1]} : vector<8x128xf32> to vector<8x32xf32>
    %180 = vector.extract_strided_slice %177 {offsets = [0, 64], sizes = [8, 32], strides = [1, 1]} : vector<8x128xf32> to vector<8x32xf32>
    %181 = vector.extract_strided_slice %176 {offsets = [0, 96], sizes = [8, 32], strides = [1, 1]} : vector<8x128xf32> to vector<8x32xf32>
    %182 = arith.mulf %179, %135 : vector<8x32xf32>
    %183 = arith.mulf %178, %180 : vector<8x32xf32>
    %184 = arith.addf %182, %183 : vector<8x32xf32>
    %185 = math.tanh %184 : vector<8x32xf32>
    %186 = arith.mulf %181, %185 : vector<8x32xf32>
    %c0_77 = arith.constant 0 : index
    %c0_78 = arith.constant 0 : index
    %187 = vector.load %arg6[%c0_77, %c0_78] : memref<32x256xf32, #tpu.memory_space<vmem>>, vector<32x256xf32>
    %c0_79 = arith.constant 0 : index
    %c0_80 = arith.constant 0 : index
    %188 = vector.load %arg7[%c0_79, %c0_80] : memref<64x256xf32, #tpu.memory_space<vmem>>, vector<64x256xf32>
    %cst_81 = arith.constant dense<0.000000e+00> : vector<8x256xf32>
    %189 = tpu.matmul %186, %187, %cst_81 {dimension_numbers = #tpu.dot_dimension_numbers<[1], [0], [0], [1], [0, 0, 1, 1], [], []>} : vector<8x32xf32>, vector<32x256xf32>, vector<8x256xf32> -> vector<8x256xf32>
    %cst_82 = arith.constant dense<0.000000e+00> : vector<8x256xf32>
    %190 = tpu.matmul %160, %188, %cst_82 {dimension_numbers = #tpu.dot_dimension_numbers<[1], [0], [0], [1], [0, 0, 1, 1], [], []>} : vector<8x64xf32>, vector<64x256xf32>, vector<8x256xf32> -> vector<8x256xf32>
    %191 = arith.addf %189, %190 : vector<8x256xf32>
    %192 = arith.addf %191, %11 : vector<8x256xf32>
    %cst_83 = arith.constant 5.000000e-01 : f32
    %193 = vector.broadcast %cst_83 : f32 to vector<8x256xf32>
    %194 = arith.mulf %193, %192 : vector<8x256xf32>
    %195 = math.tanh %194 : vector<8x256xf32>
    %cst_84 = arith.constant 5.000000e-01 : f32
    %196 = vector.broadcast %cst_84 : f32 to vector<8x256xf32>
    %197 = arith.mulf %196, %195 : vector<8x256xf32>
    %cst_85 = arith.constant 5.000000e-01 : f32
    %198 = vector.broadcast %cst_85 : f32 to vector<8x256xf32>
    %199 = arith.addf %197, %198 : vector<8x256xf32>
    %200 = math.tanh %192 : vector<8x256xf32>
    %201 = vector.extract_strided_slice %199 {offsets = [0, 0], sizes = [8, 64], strides = [1, 1]} : vector<8x256xf32> to vector<8x64xf32>
    %202 = vector.extract_strided_slice %199 {offsets = [0, 64], sizes = [8, 64], strides = [1, 1]} : vector<8x256xf32> to vector<8x64xf32>
    %203 = vector.extract_strided_slice %200 {offsets = [0, 128], sizes = [8, 64], strides = [1, 1]} : vector<8x256xf32> to vector<8x64xf32>
    %204 = vector.extract_strided_slice %199 {offsets = [0, 192], sizes = [8, 64], strides = [1, 1]} : vector<8x256xf32> to vector<8x64xf32>
    %205 = arith.mulf %202, %158 : vector<8x64xf32>
    %206 = arith.mulf %201, %203 : vector<8x64xf32>
    %207 = arith.addf %205, %206 : vector<8x64xf32>
    %208 = math.tanh %207 : vector<8x64xf32>
    %209 = arith.mulf %204, %208 : vector<8x64xf32>
    %210 = arith.index_cast %164 : i32 to index
    %c0_86 = arith.constant 0 : index
    %211 = vector.load %arg13[%210, %c0_86] : memref<64x64xf32, #tpu.memory_space<vmem>>, vector<8x64xf32>
    tpu.vector_store %arg13[%210, %c0_86], %209 {strides = array<i32>} : memref<64x64xf32, #tpu.memory_space<vmem>>, vector<8x64xf32>,
    %c4_i32 = arith.constant 4 : i32
    %c8_i32_87 = arith.constant 8 : i32
    %212 = arith.muli %c4_i32, %c8_i32_87 : i32
    %213 = tpu.assume_multiple %212, 8 : i32
    %c0_88 = arith.constant 0 : index
    %c0_89 = arith.constant 0 : index
    %214 = vector.load %arg4[%c0_88, %c0_89] : memref<32x128xf32, #tpu.memory_space<vmem>>, vector<32x128xf32>
    %215 = arith.index_cast %213 : i32 to index
    %c0_90 = arith.constant 0 : index
    %216 = vector.load %arg12[%215, %c0_90] : memref<64x128xf32, #tpu.memory_space<vmem>>, vector<8x128xf32>
    %cst_91 = arith.constant dense<0.000000e+00> : vector<8x128xf32>
    %217 = tpu.matmul %186, %214, %cst_91 {dimension_numbers = #tpu.dot_dimension_numbers<[1], [0], [0], [1], [0, 0, 1, 1], [], []>} : vector<8x32xf32>, vector<32x128xf32>, vector<8x128xf32> -> vector<8x128xf32>
    %218 = arith.addf %216, %217 : vector<8x128xf32>
    %cst_92 = arith.constant 5.000000e-01 : f32
    %219 = vector.broadcast %cst_92 : f32 to vector<8x128xf32>
    %220 = arith.mulf %219, %218 : vector<8x128xf32>
    %221 = math.tanh %220 : vector<8x128xf32>
    %cst_93 = arith.constant 5.000000e-01 : f32
    %222 = vector.broadcast %cst_93 : f32 to vector<8x128xf32>
    %223 = arith.mulf %222, %221 : vector<8x128xf32>
    %cst_94 = arith.constant 5.000000e-01 : f32
    %224 = vector.broadcast %cst_94 : f32 to vector<8x128xf32>
    %225 = arith.addf %223, %224 : vector<8x128xf32>
    %226 = math.tanh %218 : vector<8x128xf32>
    %227 = vector.extract_strided_slice %225 {offsets = [0, 0], sizes = [8, 32], strides = [1, 1]} : vector<8x128xf32> to vector<8x32xf32>
    %228 = vector.extract_strided_slice %225 {offsets = [0, 32], sizes = [8, 32], strides = [1, 1]} : vector<8x128xf32> to vector<8x32xf32>
    %229 = vector.extract_strided_slice %226 {offsets = [0, 64], sizes = [8, 32], strides = [1, 1]} : vector<8x128xf32> to vector<8x32xf32>
    %230 = vector.extract_strided_slice %225 {offsets = [0, 96], sizes = [8, 32], strides = [1, 1]} : vector<8x128xf32> to vector<8x32xf32>
    %231 = arith.mulf %228, %184 : vector<8x32xf32>
    %232 = arith.mulf %227, %229 : vector<8x32xf32>
    %233 = arith.addf %231, %232 : vector<8x32xf32>
    %234 = math.tanh %233 : vector<8x32xf32>
    %235 = arith.mulf %230, %234 : vector<8x32xf32>
    %c0_95 = arith.constant 0 : index
    %c0_96 = arith.constant 0 : index
    %236 = vector.load %arg6[%c0_95, %c0_96] : memref<32x256xf32, #tpu.memory_space<vmem>>, vector<32x256xf32>
    %c0_97 = arith.constant 0 : index
    %c0_98 = arith.constant 0 : index
    %237 = vector.load %arg7[%c0_97, %c0_98] : memref<64x256xf32, #tpu.memory_space<vmem>>, vector<64x256xf32>
    %cst_99 = arith.constant dense<0.000000e+00> : vector<8x256xf32>
    %238 = tpu.matmul %235, %236, %cst_99 {dimension_numbers = #tpu.dot_dimension_numbers<[1], [0], [0], [1], [0, 0, 1, 1], [], []>} : vector<8x32xf32>, vector<32x256xf32>, vector<8x256xf32> -> vector<8x256xf32>
    %cst_100 = arith.constant dense<0.000000e+00> : vector<8x256xf32>
    %239 = tpu.matmul %209, %237, %cst_100 {dimension_numbers = #tpu.dot_dimension_numbers<[1], [0], [0], [1], [0, 0, 1, 1], [], []>} : vector<8x64xf32>, vector<64x256xf32>, vector<8x256xf32> -> vector<8x256xf32>
    %240 = arith.addf %238, %239 : vector<8x256xf32>
    %241 = arith.addf %240, %11 : vector<8x256xf32>
    %cst_101 = arith.constant 5.000000e-01 : f32
    %242 = vector.broadcast %cst_101 : f32 to vector<8x256xf32>
    %243 = arith.mulf %242, %241 : vector<8x256xf32>
    %244 = math.tanh %243 : vector<8x256xf32>
    %cst_102 = arith.constant 5.000000e-01 : f32
    %245 = vector.broadcast %cst_102 : f32 to vector<8x256xf32>
    %246 = arith.mulf %245, %244 : vector<8x256xf32>
    %cst_103 = arith.constant 5.000000e-01 : f32
    %247 = vector.broadcast %cst_103 : f32 to vector<8x256xf32>
    %248 = arith.addf %246, %247 : vector<8x256xf32>
    %249 = math.tanh %241 : vector<8x256xf32>
    %250 = vector.extract_strided_slice %248 {offsets = [0, 0], sizes = [8, 64], strides = [1, 1]} : vector<8x256xf32> to vector<8x64xf32>
    %251 = vector.extract_strided_slice %248 {offsets = [0, 64], sizes = [8, 64], strides = [1, 1]} : vector<8x256xf32> to vector<8x64xf32>
    %252 = vector.extract_strided_slice %249 {offsets = [0, 128], sizes = [8, 64], strides = [1, 1]} : vector<8x256xf32> to vector<8x64xf32>
    %253 = vector.extract_strided_slice %248 {offsets = [0, 192], sizes = [8, 64], strides = [1, 1]} : vector<8x256xf32> to vector<8x64xf32>
    %254 = arith.mulf %251, %207 : vector<8x64xf32>
    %255 = arith.mulf %250, %252 : vector<8x64xf32>
    %256 = arith.addf %254, %255 : vector<8x64xf32>
    %257 = math.tanh %256 : vector<8x64xf32>
    %258 = arith.mulf %253, %257 : vector<8x64xf32>
    %259 = arith.index_cast %213 : i32 to index
    %c0_104 = arith.constant 0 : index
    %260 = vector.load %arg13[%259, %c0_104] : memref<64x64xf32, #tpu.memory_space<vmem>>, vector<8x64xf32>
    tpu.vector_store %arg13[%259, %c0_104], %258 {strides = array<i32>} : memref<64x64xf32, #tpu.memory_space<vmem>>, vector<8x64xf32>,
    %c5_i32 = arith.constant 5 : i32
    %c8_i32_105 = arith.constant 8 : i32
    %261 = arith.muli %c5_i32, %c8_i32_105 : i32
    %262 = tpu.assume_multiple %261, 8 : i32
    %c0_106 = arith.constant 0 : index
    %c0_107 = arith.constant 0 : index
    %263 = vector.load %arg4[%c0_106, %c0_107] : memref<32x128xf32, #tpu.memory_space<vmem>>, vector<32x128xf32>
    %264 = arith.index_cast %262 : i32 to index
    %c0_108 = arith.constant 0 : index
    %265 = vector.load %arg12[%264, %c0_108] : memref<64x128xf32, #tpu.memory_space<vmem>>, vector<8x128xf32>
    %cst_109 = arith.constant dense<0.000000e+00> : vector<8x128xf32>
    %266 = tpu.matmul %235, %263, %cst_109 {dimension_numbers = #tpu.dot_dimension_numbers<[1], [0], [0], [1], [0, 0, 1, 1], [], []>} : vector<8x32xf32>, vector<32x128xf32>, vector<8x128xf32> -> vector<8x128xf32>
    %267 = arith.addf %265, %266 : vector<8x128xf32>
    %cst_110 = arith.constant 5.000000e-01 : f32
    %268 = vector.broadcast %cst_110 : f32 to vector<8x128xf32>
    %269 = arith.mulf %268, %267 : vector<8x128xf32>
    %270 = math.tanh %269 : vector<8x128xf32>
    %cst_111 = arith.constant 5.000000e-01 : f32
    %271 = vector.broadcast %cst_111 : f32 to vector<8x128xf32>
    %272 = arith.mulf %271, %270 : vector<8x128xf32>
    %cst_112 = arith.constant 5.000000e-01 : f32
    %273 = vector.broadcast %cst_112 : f32 to vector<8x128xf32>
    %274 = arith.addf %272, %273 : vector<8x128xf32>
    %275 = math.tanh %267 : vector<8x128xf32>
    %276 = vector.extract_strided_slice %274 {offsets = [0, 0], sizes = [8, 32], strides = [1, 1]} : vector<8x128xf32> to vector<8x32xf32>
    %277 = vector.extract_strided_slice %274 {offsets = [0, 32], sizes = [8, 32], strides = [1, 1]} : vector<8x128xf32> to vector<8x32xf32>
    %278 = vector.extract_strided_slice %275 {offsets = [0, 64], sizes = [8, 32], strides = [1, 1]} : vector<8x128xf32> to vector<8x32xf32>
    %279 = vector.extract_strided_slice %274 {offsets = [0, 96], sizes = [8, 32], strides = [1, 1]} : vector<8x128xf32> to vector<8x32xf32>
    %280 = arith.mulf %277, %233 : vector<8x32xf32>
    %281 = arith.mulf %276, %278 : vector<8x32xf32>
    %282 = arith.addf %280, %281 : vector<8x32xf32>
    %283 = math.tanh %282 : vector<8x32xf32>
    %284 = arith.mulf %279, %283 : vector<8x32xf32>
    %c0_113 = arith.constant 0 : index
    %c0_114 = arith.constant 0 : index
    %285 = vector.load %arg6[%c0_113, %c0_114] : memref<32x256xf32, #tpu.memory_space<vmem>>, vector<32x256xf32>
    %c0_115 = arith.constant 0 : index
    %c0_116 = arith.constant 0 : index
    %286 = vector.load %arg7[%c0_115, %c0_116] : memref<64x256xf32, #tpu.memory_space<vmem>>, vector<64x256xf32>
    %cst_117 = arith.constant dense<0.000000e+00> : vector<8x256xf32>
    %287 = tpu.matmul %284, %285, %cst_117 {dimension_numbers = #tpu.dot_dimension_numbers<[1], [0], [0], [1], [0, 0, 1, 1], [], []>} : vector<8x32xf32>, vector<32x256xf32>, vector<8x256xf32> -> vector<8x256xf32>
    %cst_118 = arith.constant dense<0.000000e+00> : vector<8x256xf32>
    %288 = tpu.matmul %258, %286, %cst_118 {dimension_numbers = #tpu.dot_dimension_numbers<[1], [0], [0], [1], [0, 0, 1, 1], [], []>} : vector<8x64xf32>, vector<64x256xf32>, vector<8x256xf32> -> vector<8x256xf32>
    %289 = arith.addf %287, %288 : vector<8x256xf32>
    %290 = arith.addf %289, %11 : vector<8x256xf32>
    %cst_119 = arith.constant 5.000000e-01 : f32
    %291 = vector.broadcast %cst_119 : f32 to vector<8x256xf32>
    %292 = arith.mulf %291, %290 : vector<8x256xf32>
    %293 = math.tanh %292 : vector<8x256xf32>
    %cst_120 = arith.constant 5.000000e-01 : f32
    %294 = vector.broadcast %cst_120 : f32 to vector<8x256xf32>
    %295 = arith.mulf %294, %293 : vector<8x256xf32>
    %cst_121 = arith.constant 5.000000e-01 : f32
    %296 = vector.broadcast %cst_121 : f32 to vector<8x256xf32>
    %297 = arith.addf %295, %296 : vector<8x256xf32>
    %298 = math.tanh %290 : vector<8x256xf32>
    %299 = vector.extract_strided_slice %297 {offsets = [0, 0], sizes = [8, 64], strides = [1, 1]} : vector<8x256xf32> to vector<8x64xf32>
    %300 = vector.extract_strided_slice %297 {offsets = [0, 64], sizes = [8, 64], strides = [1, 1]} : vector<8x256xf32> to vector<8x64xf32>
    %301 = vector.extract_strided_slice %298 {offsets = [0, 128], sizes = [8, 64], strides = [1, 1]} : vector<8x256xf32> to vector<8x64xf32>
    %302 = vector.extract_strided_slice %297 {offsets = [0, 192], sizes = [8, 64], strides = [1, 1]} : vector<8x256xf32> to vector<8x64xf32>
    %303 = arith.mulf %300, %256 : vector<8x64xf32>
    %304 = arith.mulf %299, %301 : vector<8x64xf32>
    %305 = arith.addf %303, %304 : vector<8x64xf32>
    %306 = math.tanh %305 : vector<8x64xf32>
    %307 = arith.mulf %302, %306 : vector<8x64xf32>
    %308 = arith.index_cast %262 : i32 to index
    %c0_122 = arith.constant 0 : index
    %309 = vector.load %arg13[%308, %c0_122] : memref<64x64xf32, #tpu.memory_space<vmem>>, vector<8x64xf32>
    tpu.vector_store %arg13[%308, %c0_122], %307 {strides = array<i32>} : memref<64x64xf32, #tpu.memory_space<vmem>>, vector<8x64xf32>,
    %c6_i32 = arith.constant 6 : i32
    %c8_i32_123 = arith.constant 8 : i32
    %310 = arith.muli %c6_i32, %c8_i32_123 : i32
    %311 = tpu.assume_multiple %310, 8 : i32
    %c0_124 = arith.constant 0 : index
    %c0_125 = arith.constant 0 : index
    %312 = vector.load %arg4[%c0_124, %c0_125] : memref<32x128xf32, #tpu.memory_space<vmem>>, vector<32x128xf32>
    %313 = arith.index_cast %311 : i32 to index
    %c0_126 = arith.constant 0 : index
    %314 = vector.load %arg12[%313, %c0_126] : memref<64x128xf32, #tpu.memory_space<vmem>>, vector<8x128xf32>
    %cst_127 = arith.constant dense<0.000000e+00> : vector<8x128xf32>
    %315 = tpu.matmul %284, %312, %cst_127 {dimension_numbers = #tpu.dot_dimension_numbers<[1], [0], [0], [1], [0, 0, 1, 1], [], []>} : vector<8x32xf32>, vector<32x128xf32>, vector<8x128xf32> -> vector<8x128xf32>
    %316 = arith.addf %314, %315 : vector<8x128xf32>
    %cst_128 = arith.constant 5.000000e-01 : f32
    %317 = vector.broadcast %cst_128 : f32 to vector<8x128xf32>
    %318 = arith.mulf %317, %316 : vector<8x128xf32>
    %319 = math.tanh %318 : vector<8x128xf32>
    %cst_129 = arith.constant 5.000000e-01 : f32
    %320 = vector.broadcast %cst_129 : f32 to vector<8x128xf32>
    %321 = arith.mulf %320, %319 : vector<8x128xf32>
    %cst_130 = arith.constant 5.000000e-01 : f32
    %322 = vector.broadcast %cst_130 : f32 to vector<8x128xf32>
    %323 = arith.addf %321, %322 : vector<8x128xf32>
    %324 = math.tanh %316 : vector<8x128xf32>
    %325 = vector.extract_strided_slice %323 {offsets = [0, 0], sizes = [8, 32], strides = [1, 1]} : vector<8x128xf32> to vector<8x32xf32>
    %326 = vector.extract_strided_slice %323 {offsets = [0, 32], sizes = [8, 32], strides = [1, 1]} : vector<8x128xf32> to vector<8x32xf32>
    %327 = vector.extract_strided_slice %324 {offsets = [0, 64], sizes = [8, 32], strides = [1, 1]} : vector<8x128xf32> to vector<8x32xf32>
    %328 = vector.extract_strided_slice %323 {offsets = [0, 96], sizes = [8, 32], strides = [1, 1]} : vector<8x128xf32> to vector<8x32xf32>
    %329 = arith.mulf %326, %282 : vector<8x32xf32>
    %330 = arith.mulf %325, %327 : vector<8x32xf32>
    %331 = arith.addf %329, %330 : vector<8x32xf32>
    %332 = math.tanh %331 : vector<8x32xf32>
    %333 = arith.mulf %328, %332 : vector<8x32xf32>
    %c0_131 = arith.constant 0 : index
    %c0_132 = arith.constant 0 : index
    %334 = vector.load %arg6[%c0_131, %c0_132] : memref<32x256xf32, #tpu.memory_space<vmem>>, vector<32x256xf32>
    %c0_133 = arith.constant 0 : index
    %c0_134 = arith.constant 0 : index
    %335 = vector.load %arg7[%c0_133, %c0_134] : memref<64x256xf32, #tpu.memory_space<vmem>>, vector<64x256xf32>
    %cst_135 = arith.constant dense<0.000000e+00> : vector<8x256xf32>
    %336 = tpu.matmul %333, %334, %cst_135 {dimension_numbers = #tpu.dot_dimension_numbers<[1], [0], [0], [1], [0, 0, 1, 1], [], []>} : vector<8x32xf32>, vector<32x256xf32>, vector<8x256xf32> -> vector<8x256xf32>
    %cst_136 = arith.constant dense<0.000000e+00> : vector<8x256xf32>
    %337 = tpu.matmul %307, %335, %cst_136 {dimension_numbers = #tpu.dot_dimension_numbers<[1], [0], [0], [1], [0, 0, 1, 1], [], []>} : vector<8x64xf32>, vector<64x256xf32>, vector<8x256xf32> -> vector<8x256xf32>
    %338 = arith.addf %336, %337 : vector<8x256xf32>
    %339 = arith.addf %338, %11 : vector<8x256xf32>
    %cst_137 = arith.constant 5.000000e-01 : f32
    %340 = vector.broadcast %cst_137 : f32 to vector<8x256xf32>
    %341 = arith.mulf %340, %339 : vector<8x256xf32>
    %342 = math.tanh %341 : vector<8x256xf32>
    %cst_138 = arith.constant 5.000000e-01 : f32
    %343 = vector.broadcast %cst_138 : f32 to vector<8x256xf32>
    %344 = arith.mulf %343, %342 : vector<8x256xf32>
    %cst_139 = arith.constant 5.000000e-01 : f32
    %345 = vector.broadcast %cst_139 : f32 to vector<8x256xf32>
    %346 = arith.addf %344, %345 : vector<8x256xf32>
    %347 = math.tanh %339 : vector<8x256xf32>
    %348 = vector.extract_strided_slice %346 {offsets = [0, 0], sizes = [8, 64], strides = [1, 1]} : vector<8x256xf32> to vector<8x64xf32>
    %349 = vector.extract_strided_slice %346 {offsets = [0, 64], sizes = [8, 64], strides = [1, 1]} : vector<8x256xf32> to vector<8x64xf32>
    %350 = vector.extract_strided_slice %347 {offsets = [0, 128], sizes = [8, 64], strides = [1, 1]} : vector<8x256xf32> to vector<8x64xf32>
    %351 = vector.extract_strided_slice %346 {offsets = [0, 192], sizes = [8, 64], strides = [1, 1]} : vector<8x256xf32> to vector<8x64xf32>
    %352 = arith.mulf %349, %305 : vector<8x64xf32>
    %353 = arith.mulf %348, %350 : vector<8x64xf32>
    %354 = arith.addf %352, %353 : vector<8x64xf32>
    %355 = math.tanh %354 : vector<8x64xf32>
    %356 = arith.mulf %351, %355 : vector<8x64xf32>
    %357 = arith.index_cast %311 : i32 to index
    %c0_140 = arith.constant 0 : index
    %358 = vector.load %arg13[%357, %c0_140] : memref<64x64xf32, #tpu.memory_space<vmem>>, vector<8x64xf32>
    tpu.vector_store %arg13[%357, %c0_140], %356 {strides = array<i32>} : memref<64x64xf32, #tpu.memory_space<vmem>>, vector<8x64xf32>,
    %c7_i32 = arith.constant 7 : i32
    %c8_i32_141 = arith.constant 8 : i32
    %359 = arith.muli %c7_i32, %c8_i32_141 : i32
    %360 = tpu.assume_multiple %359, 8 : i32
    %c0_142 = arith.constant 0 : index
    %c0_143 = arith.constant 0 : index
    %361 = vector.load %arg4[%c0_142, %c0_143] : memref<32x128xf32, #tpu.memory_space<vmem>>, vector<32x128xf32>
    %362 = arith.index_cast %360 : i32 to index
    %c0_144 = arith.constant 0 : index
    %363 = vector.load %arg12[%362, %c0_144] : memref<64x128xf32, #tpu.memory_space<vmem>>, vector<8x128xf32>
    %cst_145 = arith.constant dense<0.000000e+00> : vector<8x128xf32>
    %364 = tpu.matmul %333, %361, %cst_145 {dimension_numbers = #tpu.dot_dimension_numbers<[1], [0], [0], [1], [0, 0, 1, 1], [], []>} : vector<8x32xf32>, vector<32x128xf32>, vector<8x128xf32> -> vector<8x128xf32>
    %365 = arith.addf %363, %364 : vector<8x128xf32>
    %cst_146 = arith.constant 5.000000e-01 : f32
    %366 = vector.broadcast %cst_146 : f32 to vector<8x128xf32>
    %367 = arith.mulf %366, %365 : vector<8x128xf32>
    %368 = math.tanh %367 : vector<8x128xf32>
    %cst_147 = arith.constant 5.000000e-01 : f32
    %369 = vector.broadcast %cst_147 : f32 to vector<8x128xf32>
    %370 = arith.mulf %369, %368 : vector<8x128xf32>
    %cst_148 = arith.constant 5.000000e-01 : f32
    %371 = vector.broadcast %cst_148 : f32 to vector<8x128xf32>
    %372 = arith.addf %370, %371 : vector<8x128xf32>
    %373 = math.tanh %365 : vector<8x128xf32>
    %374 = vector.extract_strided_slice %372 {offsets = [0, 0], sizes = [8, 32], strides = [1, 1]} : vector<8x128xf32> to vector<8x32xf32>
    %375 = vector.extract_strided_slice %372 {offsets = [0, 32], sizes = [8, 32], strides = [1, 1]} : vector<8x128xf32> to vector<8x32xf32>
    %376 = vector.extract_strided_slice %373 {offsets = [0, 64], sizes = [8, 32], strides = [1, 1]} : vector<8x128xf32> to vector<8x32xf32>
    %377 = vector.extract_strided_slice %372 {offsets = [0, 96], sizes = [8, 32], strides = [1, 1]} : vector<8x128xf32> to vector<8x32xf32>
    %378 = arith.mulf %375, %331 : vector<8x32xf32>
    %379 = arith.mulf %374, %376 : vector<8x32xf32>
    %380 = arith.addf %378, %379 : vector<8x32xf32>
    %381 = math.tanh %380 : vector<8x32xf32>
    %382 = arith.mulf %377, %381 : vector<8x32xf32>
    %c0_149 = arith.constant 0 : index
    %c0_150 = arith.constant 0 : index
    %383 = vector.load %arg6[%c0_149, %c0_150] : memref<32x256xf32, #tpu.memory_space<vmem>>, vector<32x256xf32>
    %c0_151 = arith.constant 0 : index
    %c0_152 = arith.constant 0 : index
    %384 = vector.load %arg7[%c0_151, %c0_152] : memref<64x256xf32, #tpu.memory_space<vmem>>, vector<64x256xf32>
    %cst_153 = arith.constant dense<0.000000e+00> : vector<8x256xf32>
    %385 = tpu.matmul %382, %383, %cst_153 {dimension_numbers = #tpu.dot_dimension_numbers<[1], [0], [0], [1], [0, 0, 1, 1], [], []>} : vector<8x32xf32>, vector<32x256xf32>, vector<8x256xf32> -> vector<8x256xf32>
    %cst_154 = arith.constant dense<0.000000e+00> : vector<8x256xf32>
    %386 = tpu.matmul %356, %384, %cst_154 {dimension_numbers = #tpu.dot_dimension_numbers<[1], [0], [0], [1], [0, 0, 1, 1], [], []>} : vector<8x64xf32>, vector<64x256xf32>, vector<8x256xf32> -> vector<8x256xf32>
    %387 = arith.addf %385, %386 : vector<8x256xf32>
    %388 = arith.addf %387, %11 : vector<8x256xf32>
    %cst_155 = arith.constant 5.000000e-01 : f32
    %389 = vector.broadcast %cst_155 : f32 to vector<8x256xf32>
    %390 = arith.mulf %389, %388 : vector<8x256xf32>
    %391 = math.tanh %390 : vector<8x256xf32>
    %cst_156 = arith.constant 5.000000e-01 : f32
    %392 = vector.broadcast %cst_156 : f32 to vector<8x256xf32>
    %393 = arith.mulf %392, %391 : vector<8x256xf32>
    %cst_157 = arith.constant 5.000000e-01 : f32
    %394 = vector.broadcast %cst_157 : f32 to vector<8x256xf32>
    %395 = arith.addf %393, %394 : vector<8x256xf32>
    %396 = math.tanh %388 : vector<8x256xf32>
    %397 = vector.extract_strided_slice %395 {offsets = [0, 0], sizes = [8, 64], strides = [1, 1]} : vector<8x256xf32> to vector<8x64xf32>
    %398 = vector.extract_strided_slice %395 {offsets = [0, 64], sizes = [8, 64], strides = [1, 1]} : vector<8x256xf32> to vector<8x64xf32>
    %399 = vector.extract_strided_slice %396 {offsets = [0, 128], sizes = [8, 64], strides = [1, 1]} : vector<8x256xf32> to vector<8x64xf32>
    %400 = vector.extract_strided_slice %395 {offsets = [0, 192], sizes = [8, 64], strides = [1, 1]} : vector<8x256xf32> to vector<8x64xf32>
    %401 = arith.mulf %398, %354 : vector<8x64xf32>
    %402 = arith.mulf %397, %399 : vector<8x64xf32>
    %403 = arith.addf %401, %402 : vector<8x64xf32>
    %404 = math.tanh %403 : vector<8x64xf32>
    %405 = arith.mulf %400, %404 : vector<8x64xf32>
    %406 = arith.index_cast %360 : i32 to index
    %c0_158 = arith.constant 0 : index
    %407 = vector.load %arg13[%406, %c0_158] : memref<64x64xf32, #tpu.memory_space<vmem>>, vector<8x64xf32>
    tpu.vector_store %arg13[%406, %c0_158], %405 {strides = array<i32>} : memref<64x64xf32, #tpu.memory_space<vmem>>, vector<8x64xf32>,
    %c8_i32_159 = arith.constant 8 : i32
    %c0_160 = arith.constant 0 : index
    %c0_161 = arith.constant 0 : index
    %408 = vector.load %arg13[%c0_160, %c0_161] : memref<64x64xf32, #tpu.memory_space<vmem>>, vector<64x64xf32>
    %c0_162 = arith.constant 0 : index
    %c0_163 = arith.constant 0 : index
    %409 = vector.load %arg9[%c0_162, %c0_163] : memref<64x1xf32, #tpu.memory_space<vmem>>, vector<64x1xf32>
    %cst_164 = arith.constant dense<0.000000e+00> : vector<64x1xf32>
    %410 = tpu.matmul %408, %409, %cst_164 {dimension_numbers = #tpu.dot_dimension_numbers<[1], [0], [0], [1], [0, 0, 1, 1], [], []>} : vector<64x64xf32>, vector<64x1xf32>, vector<64x1xf32> -> vector<64x1xf32>
    %c0_165 = arith.constant 0 : index
    %c0_166 = arith.constant 0 : index
    %411 = vector.load %arg10[%c0_165, %c0_166] : memref<1x1xf32, #tpu.memory_space<vmem>>, vector<1x1xf32>
    %412 = vector.broadcast %411 : vector<1x1xf32> to vector<64x1xf32>
    %413 = arith.addf %410, %412 : vector<64x1xf32>
    %c0_167 = arith.constant 0 : index
    %c0_168 = arith.constant 0 : index
    %414 = vector.load %arg11[%c0_167, %c0_168] : memref<64x1xf32, #tpu.memory_space<vmem>>, vector<64x1xf32>
    tpu.vector_store %arg11[%c0_167, %c0_168], %413 {strides = array<i32>} : memref<64x1xf32, #tpu.memory_space<vmem>>, vector<64x1xf32>,
    return
  }
  func.func @transform_0(%arg0: i32) -> (i32, i32) {
    %c0_i32 = arith.constant 0 : i32
    %c0_i32_0 = arith.constant 0 : i32
    %c0_i32_1 = arith.constant 0 : i32
    return %c0_i32, %c0_i32_0 : i32, i32
  }
  func.func @transform_1(%arg0: i32) -> (i32, i32) {
    %c0_i32 = arith.constant 0 : i32
    %c0_i32_0 = arith.constant 0 : i32
    %c0_i32_1 = arith.constant 0 : i32
    return %c0_i32, %c0_i32_0 : i32, i32
  }
  func.func @transform_2(%arg0: i32) -> (i32, i32) {
    %c0_i32 = arith.constant 0 : i32
    %c0_i32_0 = arith.constant 0 : i32
    %c0_i32_1 = arith.constant 0 : i32
    return %c0_i32, %c0_i32_0 : i32, i32
  }
  func.func @transform_3(%arg0: i32) -> (i32, i32) {
    %c0_i32 = arith.constant 0 : i32
    %c0_i32_0 = arith.constant 0 : i32
    %c0_i32_1 = arith.constant 0 : i32
    return %c0_i32, %c0_i32_0 : i32, i32
  }
  func.func @transform_4(%arg0: i32) -> (i32, i32) {
    %c0_i32 = arith.constant 0 : i32
    %c0_i32_0 = arith.constant 0 : i32
    %c0_i32_1 = arith.constant 0 : i32
    return %c0_i32, %c0_i32_0 : i32, i32
  }
  func.func @transform_5(%arg0: i32) -> (i32, i32) {
    %c0_i32 = arith.constant 0 : i32
    %c0_i32_0 = arith.constant 0 : i32
    %c0_i32_1 = arith.constant 0 : i32
    return %c0_i32, %c0_i32_0 : i32, i32
  }
  func.func @transform_6(%arg0: i32) -> (i32, i32) {
    %c0_i32 = arith.constant 0 : i32
    %c0_i32_0 = arith.constant 0 : i32
    %c0_i32_1 = arith.constant 0 : i32
    return %c0_i32, %c0_i32_0 : i32, i32
  }
  func.func @transform_7(%arg0: i32) -> (i32, i32) {
    %c0_i32 = arith.constant 0 : i32
    %c0_i32_0 = arith.constant 0 : i32
    %c0_i32_1 = arith.constant 0 : i32
    return %c0_i32, %c0_i32_0 : i32, i32
  }
  func.func @transform_8(%arg0: i32) -> (i32, i32) {
    %c0_i32 = arith.constant 0 : i32
    %c0_i32_0 = arith.constant 0 : i32
    %c0_i32_1 = arith.constant 0 : i32
    return %c0_i32, %c0_i32_0 : i32, i32
  }
  func.func @transform_9(%arg0: i32) -> (i32, i32) {
    %c0_i32 = arith.constant 0 : i32
    %c0_i32_0 = arith.constant 0 : i32
    %c0_i32_1 = arith.constant 0 : i32
    return %c0_i32, %c0_i32_0 : i32, i32
  }
  func.func @transform_10(%arg0: i32) -> (i32, i32) {
    %c0_i32 = arith.constant 0 : i32
    %c0_i32_0 = arith.constant 0 : i32
    %c0_i32_1 = arith.constant 0 : i32
    return %c0_i32, %c0_i32_0 : i32, i32
  }
}

</mosaic_0001>

<llo_original>
// kernel: decoder_forward.1
$region0: #{decoder_forward.1}
  #allocation0 [shape = 'u32[]', space=smem, size = 0x4, offset = 0x4, fixed_abs, tag = 'smem constant byte address 0x4 - core index']
  #allocation1 [shape = 'u32[72,128]{1,0:T(1,128)}', space=vmem, size = 0x9000, scoped, tag = 'internal scratch']
  #allocation2 [shape = 'f32[64,128]{1,0:T(8,128)}', space=vmem, size = 0x8000, scoped, tag = 'scratch operand']
  #allocation3 [shape = 'f32[64,64]{1,0:T(8,128)}', space=vmem, size = 0x8000, scoped, tag = 'scratch operand']
  #allocation4 [shape = 'f32[1,1]{1,0:T(1,128)S(1)}', space=vmem, size = 0x200, scoped, tag = 'scoped memory for decoder_forward.1']
  %s0 = inlined_call_operand.vmem [shape: f32[8,32], index: 0, kind: input, shape index: {}]
  %s1 = inlined_call_operand.vmem [shape: f32[64,8], index: 1, kind: input, shape index: {}]
  %s2 = inlined_call_operand.hbm [shape: f32[32,128], index: 2, kind: input, shape index: {}]
  %s3 = inlined_call_operand.hbm [shape: f32[32,128], index: 3, kind: input, shape index: {}]
  %s4 = inlined_call_operand.vmem [shape: f32[1,128], index: 4, kind: input, shape index: {}]
  %s5 = inlined_call_operand.hbm [shape: f32[32,256], index: 5, kind: input, shape index: {}]
  %s6 = inlined_call_operand.vmem [shape: f32[64,256], index: 6, kind: input, shape index: {}]
  %s7 = inlined_call_operand.vmem [shape: f32[1,256], index: 7, kind: input, shape index: {}]
  %s8 = inlined_call_operand.vmem [shape: f32[64,1], index: 8, kind: input, shape index: {}]
  %s9 = inlined_call_operand.<no memory space> [shape: f32[1,1], index: 9, kind: input, shape index: {}]
  %s10 = inlined_call_operand.vmem [shape: f32[64,1], index: 10, kind: output, shape index: {}]
  %s11 = sld [smem:[#allocation0]]
  $region62: #{decoder_forward.1} parent=0
    _
  %s13 = ssub.s32 1, %s11
  %s14 = scalar_select 0, %s13, %s11
  %v15 = vstv %s9
  %16 = vst [vmem:[#allocation4] sm:$0x1] %v15
  $region1: #{decoder_forward.1} parent=0
    #allocation5 [shape = 'u8[16384]{0}', space=vmem, size = 0x4000, scoped, tag = 'input window, operand 2, single buffered']
    #allocation6 [shape = 's32[1]{0}', space=sflag, size = 0x4, scoped, tag = 'scoped memory for decoder_forward.1']
    #allocation7 [shape = 'u8[16384]{0}', space=vmem, size = 0x4000, scoped, tag = 'input window, operand 3, single buffered']
    #allocation8 [shape = 's32[1]{0}', space=sflag, size = 0x4, scoped, tag = 'scoped memory for decoder_forward.1']
    #allocation9 [shape = 'u8[32768]{0}', space=vmem, size = 0x8000, scoped, tag = 'input window, operand 5, single buffered']
    %17 = vsyncpa [#allocation6], 0
    %18 = vsyncpa [#allocation8], 0
    // Predicated region
    $region2: #{decoder_forward.1} parent=1 // pred_check
      _
    $region3: #{decoder_forward.1} parent=1 // pred_check_branch
      %20 = sbr.rel (0) target = $region5
    $region4: #{decoder_forward.1} parent=1 // pred_region
      _
    $region5: #{decoder_forward.1} parent=1 // pred_fallthru
      _
    // Predicated region
    $region6: #{decoder_forward.1} parent=1 // pred_check
      _
    $region7: #{decoder_forward.1} parent=1 // pred_check_branch
      %22 = sbr.rel (0) target = $region9
    $region8: #{decoder_forward.1} parent=1 // pred_region
      _
    $region9: #{decoder_forward.1} parent=1 // pred_fallthru
      _
    // Predicated region
    $region10: #{decoder_forward.1} parent=1 // pred_check
      _
    $region11: #{decoder_forward.1} parent=1 // pred_check_branch
      %24 = sbr.rel (0) target = $region13
    $region12: #{decoder_forward.1} parent=1 // pred_region
      %26 = vsyncadd [#allocation6], 0
      %s27 = sshll.u32 %s2, 4
      %s28 = int_to_ptr.hbm [resolvable:$true] %s27
      %s29 = sshll.u32 [#allocation5], 4
      %s30 = int_to_ptr.vmem [resolvable:$true] %s29
      %35 = dma.hbm_to_vmem [thread:$0]  %s28, 512, %s30, [#allocation6], 128, 128, 8
    $region13: #{decoder_forward.1} parent=1 // pred_fallthru
      _
    // Predicated region
    $region14: #{decoder_forward.1} parent=1 // pred_check
      _
    $region15: #{decoder_forward.1} parent=1 // pred_check_branch
      %37 = sbr.rel (0) target = $region17
    $region16: #{decoder_forward.1} parent=1 // pred_region
      %39 = vsyncadd [#allocation8], 0
      %s40 = sshll.u32 %s3, 4
      %s41 = int_to_ptr.hbm [resolvable:$true] %s40
      %s42 = sshll.u32 [#allocation7], 4
      %s43 = int_to_ptr.vmem [resolvable:$true] %s42
      %48 = dma.hbm_to_vmem [thread:$0]  %s41, 512, %s43, [#allocation8], 128, 128, 8
    $region17: #{decoder_forward.1} parent=1 // pred_fallthru
      _
    // Predicated region
    $region18: #{decoder_forward.1} parent=1 // pred_check
      _
    $region19: #{decoder_forward.1} parent=1 // pred_check_branch
      %50 = sbr.rel (0) target = $region21
    $region20: #{decoder_forward.1} parent=1 // pred_region
      _
    $region21: #{decoder_forward.1} parent=1 // pred_fallthru
      _
    // Predicated region
    $region22: #{decoder_forward.1} parent=1 // pred_check
      _
    $region23: #{decoder_forward.1} parent=1 // pred_check_branch
      %52 = sbr.rel (0) target = $region25
    $region24: #{decoder_forward.1} parent=1 // pred_region
      %54 = vsyncadd [#allocation8], 0
      %s55 = sshll.u32 %s5, 4
      %s56 = int_to_ptr.hbm [resolvable:$true] %s55
      %s57 = sshll.u32 [#allocation9], 4
      %s58 = int_to_ptr.vmem [resolvable:$true] %s57
      %63 = dma.hbm_to_vmem [thread:$0]  %s56, 1024, %s58, [#allocation8], 256, 256, 16
    $region25: #{decoder_forward.1} parent=1 // pred_fallthru
      _
    // Predicated region
    $region26: #{decoder_forward.1} parent=1 // pred_check
      _
    $region27: #{decoder_forward.1} parent=1 // pred_check_branch
      %65 = sbr.rel (0) target = $region29
    $region28: #{decoder_forward.1} parent=1 // pred_region
      _
    $region29: #{decoder_forward.1} parent=1 // pred_fallthru
      _
    // Predicated region
    $region30: #{decoder_forward.1} parent=1 // pred_check
      _
    $region31: #{decoder_forward.1} parent=1 // pred_check_branch
      %67 = sbr.rel (0) target = $region33
    $region32: #{decoder_forward.1} parent=1 // pred_region
      _
    $region33: #{decoder_forward.1} parent=1 // pred_fallthru
      _
    // Predicated region
    $region34: #{decoder_forward.1} parent=1 // pred_check
      _
    $region35: #{decoder_forward.1} parent=1 // pred_check_branch
      %69 = sbr.rel (0) target = $region37
    $region36: #{decoder_forward.1} parent=1 // pred_region
      _
    $region37: #{decoder_forward.1} parent=1 // pred_fallthru
      _
    // Predicated region
    $region38: #{decoder_forward.1} parent=1 // pred_check
      _
    $region39: #{decoder_forward.1} parent=1 // pred_check_branch
      %71 = sbr.rel (0) target = $region41
    $region40: #{decoder_forward.1} parent=1 // pred_region
      _
    $region41: #{decoder_forward.1} parent=1 // pred_fallthru
      _
    // Predicated region
    $region42: #{decoder_forward.1} parent=1 // pred_check
      _
    $region43: #{decoder_forward.1} parent=1 // pred_check_branch
      %73 = sbr.rel (0) target = $region45
    $region44: #{decoder_forward.1} parent=1 // pred_region
      %75 = dma.done [#allocation6], 512
    $region45: #{decoder_forward.1} parent=1 // pred_fallthru
      _
    // Predicated region
    $region46: #{decoder_forward.1} parent=1 // pred_check
      _
    $region47: #{decoder_forward.1} parent=1 // pred_check_branch
      %77 = sbr.rel (0) target = $region49
    $region48: #{decoder_forward.1} parent=1 // pred_region
      %79 = dma.done [#allocation8], 512
    $region49: #{decoder_forward.1} parent=1 // pred_fallthru
      _
    // Predicated region
    $region50: #{decoder_forward.1} parent=1 // pred_check
      _
    $region51: #{decoder_forward.1} parent=1 // pred_check_branch
      %81 = sbr.rel (0) target = $region53
    $region52: #{decoder_forward.1} parent=1 // pred_region
      %83 = dma.done [#allocation8], 1024
    $region53: #{decoder_forward.1} parent=1 // pred_fallthru
      _
    %v84 = vld [vmem:[%s0] sm:$0xff]
    %v85 = vld [vmem:[#allocation5] sm:$0xff]
    %v86 = vld [vmem:[#allocation5 + $0x8] sm:$0xff]
    %v87 = vld [vmem:[#allocation5 + $0x10] sm:$0xff]
    %v88 = vld [vmem:[#allocation5 + $0x18] sm:$0xff]
    %vm89 = vcmask 261120
    %v91 = vsel %vm89, %v84, 0
    %93 = vmatpush.msra.mxu0 0.0
    %94 = vmatpush.msra.mxu0 0.0
    %95 = vmatpush.msra.mxu0 0.0
    %96 = vmatpush.msra.mxu0 0.0
    %97 = vmatpush.msra.mxu0 0.0
    %98 = vmatpush.msra.mxu0 0.0
    %99 = vmatpush.msra.mxu0 0.0
    %100 = vmatpush.msra.mxu0 0.0
    %101 = vmatpush.msra.mxu0 0.0
    %102 = vmatpush.msra.mxu0 0.0
    %103 = vmatpush.msra.mxu0 0.0
    %104 = vmatpush.msra.mxu0 0.0
    %105 = vmatpush.msra.mxu0 %v88
    %106 = vmatpush.msra.mxu0 %v87
    %107 = vmatpush.msra.mxu0 %v86
    %108 = vmatpush.msra.mxu0 %v85
    %109 = vmatmul.f32.gmra.mxu0 %v91
    %v110 = vpop.f32.mrf.mxu0
    %v111 = vadd.f32 0.0, %v110
    %112 = vdwg.mxu0
    %v113 = vld [vmem:[%s1] sm:$0xff]
    %v114 = vld [vmem:[%s1 + $0x8] sm:$0xff]
    %v115 = vld [vmem:[%s1 + $0x10] sm:$0xff]
    %v116 = vld [vmem:[%s1 + $0x18] sm:$0xff]
    %v117 = vld [vmem:[%s1 + $0x20] sm:$0xff]
    %v118 = vld [vmem:[%s1 + $0x28] sm:$0xff]
    %v119 = vld [vmem:[%s1 + $0x30] sm:$0xff]
    %v120 = vld [vmem:[%s1 + $0x38] sm:$0xff]
    %v121 = vld [vmem:[%s4] sm:$0x1]
    %v123 = vperm.slane %v121, 0
    %vm125 = vcmask 64512
    %v127 = vsel %vm125, %v113, 0
    %v130 = vsel %vm125, %v114, 0
    %v133 = vsel %vm125, %v115, 0
    %v136 = vsel %vm125, %v116, 0
    %v139 = vsel %vm125, %v117, 0
    %v142 = vsel %vm125, %v118, 0
    %v145 = vsel %vm125, %v119, 0
    %v148 = vsel %vm125, %v120, 0
    %150 = vmatpush.msra.mxu0 0.0
    %151 = vmatpush.msra.mxu0 0.0
    %152 = vmatpush.msra.mxu0 0.0
    %153 = vmatpush.msra.mxu0 0.0
    %154 = vmatpush.msra.mxu0 0.0
    %155 = vmatpush.msra.mxu0 0.0
    %156 = vmatpush.msra.mxu0 0.0
    %157 = vmatpush.msra.mxu0 0.0
    %158 = vmatpush.msra.mxu0 0.0
    %159 = vmatpush.msra.mxu0 0.0
    %160 = vmatpush.msra.mxu0 0.0
    %161 = vmatpush.msra.mxu0 0.0
    %162 = vmatpush.msra.mxu0 0.0
    %163 = vmatpush.msra.mxu0 0.0
    %164 = vmatpush.msra.mxu0 0.0
    %165 = vmatpush.msra.mxu0 %v111
    %166 = vmatmul.f32.gmra.mxu0 %v127
    %v167 = vpop.f32.mrf.mxu0
    %v168 = vadd.f32 %v123, %v167
    %169 = vmatmul.f32.gmra.mxu0 %v130
    %v170 = vpop.f32.mrf.mxu0
    %v171 = vadd.f32 %v123, %v170
    %172 = vmatmul.f32.gmra.mxu0 %v133
    %v173 = vpop.f32.mrf.mxu0
    %v174 = vadd.f32 %v123, %v173
    %175 = vmatmul.f32.gmra.mxu0 %v136
    %v176 = vpop.f32.mrf.mxu0
    %v177 = vadd.f32 %v123, %v176
    %178 = vmatmul.f32.gmra.mxu0 %v139
    %v179 = vpop.f32.mrf.mxu0
    %v180 = vadd.f32 %v123, %v179
    %181 = vmatmul.f32.gmra.mxu0 %v142
    %v182 = vpop.f32.mrf.mxu0
    %v183 = vadd.f32 %v123, %v182
    %184 = vmatmul.f32.gmra.mxu0 %v145
    %v185 = vpop.f32.mrf.mxu0
    %v186 = vadd.f32 %v123, %v185
    %187 = vmatmul.f32.gmra.mxu0 %v148
    %v188 = vpop.f32.mrf.mxu0
    %v189 = vadd.f32 %v123, %v188
    %190 = vdwg.mxu0
    %191 = vst [vmem:[#allocation2] sm:$0xff] %v168
    %192 = vst [vmem:[#allocation2 + $0x8] sm:$0xff] %v171
    %193 = vst [vmem:[#allocation2 + $0x10] sm:$0xff] %v174
    %194 = vst [vmem:[#allocation2 + $0x18] sm:$0xff] %v177
    %195 = vst [vmem:[#allocation2 + $0x20] sm:$0xff] %v180
    %196 = vst [vmem:[#allocation2 + $0x28] sm:$0xff] %v183
    %197 = vst [vmem:[#allocation2 + $0x30] sm:$0xff] %v186
    %198 = vst [vmem:[#allocation2 + $0x38] sm:$0xff] %v189
    %v199 = vld [vmem:[%s7] sm:$0x3]
    %v201 = vperm.slane %v199, 0
    %v202 = vperm.slane %v199, 1
    %v205 = vld [vmem:[#allocation7] sm:$0xff]
    %v206 = vld [vmem:[#allocation7 + $0x8] sm:$0xff]
    %v207 = vld [vmem:[#allocation7 + $0x10] sm:$0xff]
    %v208 = vld [vmem:[#allocation7 + $0x18] sm:$0xff]
    %v209 = vld [vmem:[#allocation2] sm:$0xff]
    %v211 = vsel %vm89, 0.0, 0
    %213 = vmatpush.msra.mxu0 0.0
    %214 = vmatpush.msra.mxu0 0.0
    %215 = vmatpush.msra.mxu0 0.0
    %216 = vmatpush.msra.mxu0 0.0
    %217 = vmatpush.msra.mxu0 0.0
    %218 = vmatpush.msra.mxu0 0.0
    %219 = vmatpush.msra.mxu0 0.0
    %220 = vmatpush.msra.mxu0 0.0
    %221 = vmatpush.msra.mxu0 0.0
    %222 = vmatpush.msra.mxu0 0.0
    %223 = vmatpush.msra.mxu0 0.0
    %224 = vmatpush.msra.mxu0 0.0
    %225 = vmatpush.msra.mxu0 %v208
    %226 = vmatpush.msra.mxu0 %v207
    %227 = vmatpush.msra.mxu0 %v206
    %228 = vmatpush.msra.mxu0 %v205
    %229 = vmatmul.f32.gmra.mxu0 %v211
    %v230 = vpop.f32.mrf.mxu0
    %v231 = vadd.f32 0.0, %v230
    %232 = vdwg.mxu0
    %v233 = vadd.f32 %v209, %v231
    %v234 = vmul.f32 %v233, 0.5
    %v235 = vtanh.pop %v234
    %v236 = vmul.f32 %v235, 0.5
    %v237 = vadd.f32 %v236, 0.5
    %v238 = vtanh.pop %v233
    %v239 = vmul.f32 %v237, 0.0
    %241 = vrot.lane.b32.xlu0 %v238, 64
    %v242 = vpop.permute.xlu0 %241
    %v244 = vmul.f32 %v237, %v242
    %246 = vrot.lane.b32.xlu0 %v244, 32
    %v247 = vpop.permute.xlu0 %246
    %v249 = vadd.f32 %v239, %v247
    %v250 = vtanh.pop %v249
    %252 = vrot.lane.b32.xlu0 %v250, 64
    %v253 = vpop.permute.xlu0 %252
    %v255 = vmul.f32 %v237, %v253
    %v256 = vld [vmem:[#allocation9] sm:$0xff]
    %v257 = vld [vmem:[#allocation9 + $0x8] sm:$0xff]
    %v258 = vld [vmem:[#allocation9 + $0x10] sm:$0xff]
    %v259 = vld [vmem:[#allocation9 + $0x18] sm:$0xff]
    %v260 = vld [vmem:[#allocation9 + $0x20] sm:$0xff]
    %v261 = vld [vmem:[#allocation9 + $0x28] sm:$0xff]
    %v262 = vld [vmem:[#allocation9 + $0x30] sm:$0xff]
    %v263 = vld [vmem:[#allocation9 + $0x38] sm:$0xff]
    %v264 = vld [vmem:[%s6] sm:$0xff]
    %v265 = vld [vmem:[%s6 + $0x8] sm:$0xff]
    %v266 = vld [vmem:[%s6 + $0x10] sm:$0xff]
    %v267 = vld [vmem:[%s6 + $0x18] sm:$0xff]
    %v268 = vld [vmem:[%s6 + $0x20] sm:$0xff]
    %v269 = vld [vmem:[%s6 + $0x28] sm:$0xff]
    %v270 = vld [vmem:[%s6 + $0x30] sm:$0xff]
    %v271 = vld [vmem:[%s6 + $0x38] sm:$0xff]
    %v272 = vld [vmem:[%s6 + $0x40] sm:$0xff]
    %v273 = vld [vmem:[%s6 + $0x48] sm:$0xff]
    %v274 = vld [vmem:[%s6 + $0x50] sm:$0xff]
    %v275 = vld [vmem:[%s6 + $0x58] sm:$0xff]
    %v276 = vld [vmem:[%s6 + $0x60] sm:$0xff]
    %v277 = vld [vmem:[%s6 + $0x68] sm:$0xff]
    %v278 = vld [vmem:[%s6 + $0x70] sm:$0xff]
    %v279 = vld [vmem:[%s6 + $0x78] sm:$0xff]
    %vm280 = vcmask 523264
    %v281 = vsel %vm280, 0.0, 0
    %283 = vmatpush.msra.mxu0 0.0
    %284 = vmatpush.msra.mxu0 0.0
    %285 = vmatpush.msra.mxu0 0.0
    %286 = vmatpush.msra.mxu0 0.0
    %287 = vmatpush.msra.mxu0 0.0
    %288 = vmatpush.msra.mxu0 0.0
    %289 = vmatpush.msra.mxu0 0.0
    %290 = vmatpush.msra.mxu0 0.0
    %291 = vmatpush.msra.mxu0 %v278
    %292 = vmatpush.msra.mxu0 %v276
    %293 = vmatpush.msra.mxu0 %v274
    %294 = vmatpush.msra.mxu0 %v272
    %295 = vmatpush.msra.mxu0 %v270
    %296 = vmatpush.msra.mxu0 %v268
    %297 = vmatpush.msra.mxu0 %v266
    %298 = vmatpush.msra.mxu0 %v264
    %299 = vmatmul.f32.gmra.mxu0 %v281
    %v300 = vpop.f32.mrf.mxu0
    %v301 = vadd.f32 0.0, %v300
    %302 = vdwg.mxu0
    %303 = vmatpush.msra.mxu0 0.0
    %304 = vmatpush.msra.mxu0 0.0
    %305 = vmatpush.msra.mxu0 0.0
    %306 = vmatpush.msra.mxu0 0.0
    %307 = vmatpush.msra.mxu0 0.0
    %308 = vmatpush.msra.mxu0 0.0
    %309 = vmatpush.msra.mxu0 0.0
    %310 = vmatpush.msra.mxu0 0.0
    %311 = vmatpush.msra.mxu0 %v279
    %312 = vmatpush.msra.mxu0 %v277
    %313 = vmatpush.msra.mxu0 %v275
    %314 = vmatpush.msra.mxu0 %v273
    %315 = vmatpush.msra.mxu0 %v271
    %316 = vmatpush.msra.mxu0 %v269
    %317 = vmatpush.msra.mxu0 %v267
    %318 = vmatpush.msra.mxu0 %v265
    %319 = vmatmul.f32.gmra.mxu0 %v281
    %v320 = vpop.f32.mrf.mxu0
    %v321 = vadd.f32 0.0, %v320
    %322 = vdwg.mxu0
    %324 = vrot.lane.b32.xlu0 %v255, 32
    %v325 = vpop.permute.xlu0 %324
    %v326 = vsel %vm89, %v325, 0
    %328 = vmatpush.msra.mxu0 0.0
    %329 = vmatpush.msra.mxu0 0.0
    %330 = vmatpush.msra.mxu0 0.0
    %331 = vmatpush.msra.mxu0 0.0
    %332 = vmatpush.msra.mxu0 0.0
    %333 = vmatpush.msra.mxu0 0.0
    %334 = vmatpush.msra.mxu0 0.0
    %335 = vmatpush.msra.mxu0 0.0
    %336 = vmatpush.msra.mxu0 0.0
    %337 = vmatpush.msra.mxu0 0.0
    %338 = vmatpush.msra.mxu0 0.0
    %339 = vmatpush.msra.mxu0 0.0
    %340 = vmatpush.msra.mxu0 %v262
    %341 = vmatpush.msra.mxu0 %v260
    %342 = vmatpush.msra.mxu0 %v258
    %343 = vmatpush.msra.mxu0 %v256
    %344 = vmatmul.f32.gmra.mxu0 %v326
    %v345 = vpop.f32.mrf.mxu0
    %v346 = vadd.f32 %v301, %v345
    %347 = vdwg.mxu0
    %348 = vmatpush.msra.mxu0 0.0
    %349 = vmatpush.msra.mxu0 0.0
    %350 = vmatpush.msra.mxu0 0.0
    %351 = vmatpush.msra.mxu0 0.0
    %352 = vmatpush.msra.mxu0 0.0
    %353 = vmatpush.msra.mxu0 0.0
    %354 = vmatpush.msra.mxu0 0.0
    %355 = vmatpush.msra.mxu0 0.0
    %356 = vmatpush.msra.mxu0 0.0
    %357 = vmatpush.msra.mxu0 0.0
    %358 = vmatpush.msra.mxu0 0.0
    %359 = vmatpush.msra.mxu0 0.0
    %360 = vmatpush.msra.mxu0 %v263
    %361 = vmatpush.msra.mxu0 %v261
    %362 = vmatpush.msra.mxu0 %v259
    %363 = vmatpush.msra.mxu0 %v257
    %364 = vmatmul.f32.gmra.mxu0 %v326
    %v365 = vpop.f32.mrf.mxu0
    %v366 = vadd.f32 %v321, %v365
    %367 = vdwg.mxu0
    %v368 = vadd.f32 %v346, %v201
    %v369 = vadd.f32 %v366, %v202
    %v370 = vmul.f32 %v368, 0.5
    %v371 = vmul.f32 %v369, 0.5
    %v372 = vtanh.pop %v370
    %v373 = vtanh.pop %v371
    %v374 = vmul.f32 %v372, 0.5
    %v375 = vmul.f32 %v373, 0.5
    %v376 = vadd.f32 %v374, 0.5
    %v377 = vadd.f32 %v375, 0.5
    %v378 = vtanh.pop %v369
    %v379 = vmul.f32 %v376, 0.0
    %v380 = vmul.f32 %v376, %v378
    %382 = vrot.lane.b32.xlu0 %v380, 64
    %v383 = vpop.permute.xlu0 %382
    %v385 = vadd.f32 %v379, %v383
    %v386 = vtanh.pop %v385
    %v387 = vmul.f32 %v377, %v386
    %389 = vrot.lane.b32.xlu0 %v387, 64
    %v390 = vpop.permute.xlu0 %389
    %392 = vst.msk [vmem:[#allocation3] sm:$0xff] %vm280, %v390
    %v393 = vld [vmem:[#allocation7] sm:$0xff]
    %v394 = vld [vmem:[#allocation7 + $0x8] sm:$0xff]
    %v395 = vld [vmem:[#allocation7 + $0x10] sm:$0xff]
    %v396 = vld [vmem:[#allocation7 + $0x18] sm:$0xff]
    %s397 = scalar_lea.vmem [#allocation2], 8
    %v398 = vld [vmem:[%s397] sm:$0xff]
    %399 = vmatpush.msra.mxu0 0.0
    %400 = vmatpush.msra.mxu0 0.0
    %401 = vmatpush.msra.mxu0 0.0
    %402 = vmatpush.msra.mxu0 0.0
    %403 = vmatpush.msra.mxu0 0.0
    %404 = vmatpush.msra.mxu0 0.0
    %405 = vmatpush.msra.mxu0 0.0
    %406 = vmatpush.msra.mxu0 0.0
    %407 = vmatpush.msra.mxu0 0.0
    %408 = vmatpush.msra.mxu0 0.0
    %409 = vmatpush.msra.mxu0 0.0
    %410 = vmatpush.msra.mxu0 0.0
    %411 = vmatpush.msra.mxu0 %v396
    %412 = vmatpush.msra.mxu0 %v395
    %413 = vmatpush.msra.mxu0 %v394
    %414 = vmatpush.msra.mxu0 %v393
    %415 = vmatmul.f32.gmra.mxu0 %v326
    %v416 = vpop.f32.mrf.mxu0
    %v417 = vadd.f32 0.0, %v416
    %418 = vdwg.mxu0
    %v419 = vadd.f32 %v398, %v417
    %v420 = vmul.f32 %v419, 0.5
    %v421 = vtanh.pop %v420
    %v422 = vmul.f32 %v421, 0.5
    %v423 = vadd.f32 %v422, 0.5
    %v424 = vtanh.pop %v419
    %v425 = vmul.f32 %v423, %v249
    %427 = vrot.lane.b32.xlu0 %v424, 64
    %v428 = vpop.permute.xlu0 %427
    %v430 = vmul.f32 %v423, %v428
    %432 = vrot.lane.b32.xlu0 %v430, 32
    %v433 = vpop.permute.xlu0 %432
    %v435 = vadd.f32 %v425, %v433
    %v436 = vtanh.pop %v435
    %438 = vrot.lane.b32.xlu0 %v436, 64
    %v439 = vpop.permute.xlu0 %438
    %v441 = vmul.f32 %v423, %v439
    %v442 = vld [vmem:[#allocation9] sm:$0xff]
    %v443 = vld [vmem:[#allocation9 + $0x8] sm:$0xff]
    %v444 = vld [vmem:[#allocation9 + $0x10] sm:$0xff]
    %v445 = vld [vmem:[#allocation9 + $0x18] sm:$0xff]
    %v446 = vld [vmem:[#allocation9 + $0x20] sm:$0xff]
    %v447 = vld [vmem:[#allocation9 + $0x28] sm:$0xff]
    %v448 = vld [vmem:[#allocation9 + $0x30] sm:$0xff]
    %v449 = vld [vmem:[#allocation9 + $0x38] sm:$0xff]
    %v450 = vld [vmem:[%s6] sm:$0xff]
    %v451 = vld [vmem:[%s6 + $0x8] sm:$0xff]
    %v452 = vld [vmem:[%s6 + $0x10] sm:$0xff]
    %v453 = vld [vmem:[%s6 + $0x18] sm:$0xff]
    %v454 = vld [vmem:[%s6 + $0x20] sm:$0xff]
    %v455 = vld [vmem:[%s6 + $0x28] sm:$0xff]
    %v456 = vld [vmem:[%s6 + $0x30] sm:$0xff]
    %v457 = vld [vmem:[%s6 + $0x38] sm:$0xff]
    %v458 = vld [vmem:[%s6 + $0x40] sm:$0xff]
    %v459 = vld [vmem:[%s6 + $0x48] sm:$0xff]
    %v460 = vld [vmem:[%s6 + $0x50] sm:$0xff]
    %v461 = vld [vmem:[%s6 + $0x58] sm:$0xff]
    %v462 = vld [vmem:[%s6 + $0x60] sm:$0xff]
    %v463 = vld [vmem:[%s6 + $0x68] sm:$0xff]
    %v464 = vld [vmem:[%s6 + $0x70] sm:$0xff]
    %v465 = vld [vmem:[%s6 + $0x78] sm:$0xff]
    %v466 = vsel %vm280, %v390, 0
    %468 = vmatpush.msra.mxu0 0.0
    %469 = vmatpush.msra.mxu0 0.0
    %470 = vmatpush.msra.mxu0 0.0
    %471 = vmatpush.msra.mxu0 0.0
    %472 = vmatpush.msra.mxu0 0.0
    %473 = vmatpush.msra.mxu0 0.0
    %474 = vmatpush.msra.mxu0 0.0
    %475 = vmatpush.msra.mxu0 0.0
    %476 = vmatpush.msra.mxu0 %v464
    %477 = vmatpush.msra.mxu0 %v462
    %478 = vmatpush.msra.mxu0 %v460
    %479 = vmatpush.msra.mxu0 %v458
    %480 = vmatpush.msra.mxu0 %v456
    %481 = vmatpush.msra.mxu0 %v454
    %482 = vmatpush.msra.mxu0 %v452
    %483 = vmatpush.msra.mxu0 %v450
    %484 = vmatmul.f32.gmra.mxu0 %v466
    %v485 = vpop.f32.mrf.mxu0
    %v486 = vadd.f32 0.0, %v485
    %487 = vdwg.mxu0
    %488 = vmatpush.msra.mxu0 0.0
    %489 = vmatpush.msra.mxu0 0.0
    %490 = vmatpush.msra.mxu0 0.0
    %491 = vmatpush.msra.mxu0 0.0
    %492 = vmatpush.msra.mxu0 0.0
    %493 = vmatpush.msra.mxu0 0.0
    %494 = vmatpush.msra.mxu0 0.0
    %495 = vmatpush.msra.mxu0 0.0
    %496 = vmatpush.msra.mxu0 %v465
    %497 = vmatpush.msra.mxu0 %v463
    %498 = vmatpush.msra.mxu0 %v461
    %499 = vmatpush.msra.mxu0 %v459
    %500 = vmatpush.msra.mxu0 %v457
    %501 = vmatpush.msra.mxu0 %v455
    %502 = vmatpush.msra.mxu0 %v453
    %503 = vmatpush.msra.mxu0 %v451
    %504 = vmatmul.f32.gmra.mxu0 %v466
    %v505 = vpop.f32.mrf.mxu0
    %v506 = vadd.f32 0.0, %v505
    %507 = vdwg.mxu0
    %509 = vrot.lane.b32.xlu0 %v441, 32
    %v510 = vpop.permute.xlu0 %509
    %v511 = vsel %vm89, %v510, 0
    %513 = vmatpush.msra.mxu0 0.0
    %514 = vmatpush.msra.mxu0 0.0
    %515 = vmatpush.msra.mxu0 0.0
    %516 = vmatpush.msra.mxu0 0.0
    %517 = vmatpush.msra.mxu0 0.0
    %518 = vmatpush.msra.mxu0 0.0
    %519 = vmatpush.msra.mxu0 0.0
    %520 = vmatpush.msra.mxu0 0.0
    %521 = vmatpush.msra.mxu0 0.0
    %522 = vmatpush.msra.mxu0 0.0
    %523 = vmatpush.msra.mxu0 0.0
    %524 = vmatpush.msra.mxu0 0.0
    %525 = vmatpush.msra.mxu0 %v448
    %526 = vmatpush.msra.mxu0 %v446
    %527 = vmatpush.msra.mxu0 %v444
    %528 = vmatpush.msra.mxu0 %v442
    %529 = vmatmul.f32.gmra.mxu0 %v511
    %v530 = vpop.f32.mrf.mxu0
    %v531 = vadd.f32 %v486, %v530
    %532 = vdwg.mxu0
    %533 = vmatpush.msra.mxu0 0.0
    %534 = vmatpush.msra.mxu0 0.0
    %535 = vmatpush.msra.mxu0 0.0
    %536 = vmatpush.msra.mxu0 0.0
    %537 = vmatpush.msra.mxu0 0.0
    %538 = vmatpush.msra.mxu0 0.0
    %539 = vmatpush.msra.mxu0 0.0
    %540 = vmatpush.msra.mxu0 0.0
    %541 = vmatpush.msra.mxu0 0.0
    %542 = vmatpush.msra.mxu0 0.0
    %543 = vmatpush.msra.mxu0 0.0
    %544 = vmatpush.msra.mxu0 0.0
    %545 = vmatpush.msra.mxu0 %v449
    %546 = vmatpush.msra.mxu0 %v447
    %547 = vmatpush.msra.mxu0 %v445
    %548 = vmatpush.msra.mxu0 %v443
    %549 = vmatmul.f32.gmra.mxu0 %v511
    %v550 = vpop.f32.mrf.mxu0
    %v551 = vadd.f32 %v506, %v550
    %552 = vdwg.mxu0
    %v553 = vadd.f32 %v531, %v201
    %v554 = vadd.f32 %v551, %v202
    %v555 = vmul.f32 %v553, 0.5
    %v556 = vmul.f32 %v554, 0.5
    %v557 = vtanh.pop %v555
    %v558 = vtanh.pop %v556
    %v559 = vmul.f32 %v557, 0.5
    %v560 = vmul.f32 %v558, 0.5
    %v561 = vadd.f32 %v559, 0.5
    %v562 = vadd.f32 %v560, 0.5
    %v563 = vtanh.pop %v554
    %v564 = vmul.f32 %v561, %v385
    %v565 = vmul.f32 %v561, %v563
    %567 = vrot.lane.b32.xlu0 %v565, 64
    %v568 = vpop.permute.xlu0 %567
    %v570 = vadd.f32 %v564, %v568
    %v571 = vtanh.pop %v570
    %v572 = vmul.f32 %v562, %v571
    %574 = vrot.lane.b32.xlu0 %v572, 64
    %v575 = vpop.permute.xlu0 %574
    %s577 = scalar_lea.vmem [#allocation3], 8
    %578 = vst.msk [vmem:[%s577] sm:$0xff] %vm280, %v575
    %v579 = vld [vmem:[#allocation7] sm:$0xff]
    %v580 = vld [vmem:[#allocation7 + $0x8] sm:$0xff]
    %v581 = vld [vmem:[#allocation7 + $0x10] sm:$0xff]
    %v582 = vld [vmem:[#allocation7 + $0x18] sm:$0xff]
    %s583 = scalar_lea.vmem [#allocation2], 16
    %v584 = vld [vmem:[%s583] sm:$0xff]
    %585 = vmatpush.msra.mxu0 0.0
    %586 = vmatpush.msra.mxu0 0.0
    %587 = vmatpush.msra.mxu0 0.0
    %588 = vmatpush.msra.mxu0 0.0
    %589 = vmatpush.msra.mxu0 0.0
    %590 = vmatpush.msra.mxu0 0.0
    %591 = vmatpush.msra.mxu0 0.0
    %592 = vmatpush.msra.mxu0 0.0
    %593 = vmatpush.msra.mxu0 0.0
    %594 = vmatpush.msra.mxu0 0.0
    %595 = vmatpush.msra.mxu0 0.0
    %596 = vmatpush.msra.mxu0 0.0
    %597 = vmatpush.msra.mxu0 %v582
    %598 = vmatpush.msra.mxu0 %v581
    %599 = vmatpush.msra.mxu0 %v580
    %600 = vmatpush.msra.mxu0 %v579
    %601 = vmatmul.f32.gmra.mxu0 %v511
    %v602 = vpop.f32.mrf.mxu0
    %v603 = vadd.f32 0.0, %v602
    %604 = vdwg.mxu0
    %v605 = vadd.f32 %v584, %v603
    %v606 = vmul.f32 %v605, 0.5
    %v607 = vtanh.pop %v606
    %v608 = vmul.f32 %v607, 0.5
    %v609 = vadd.f32 %v608, 0.5
    %v610 = vtanh.pop %v605
    %v611 = vmul.f32 %v609, %v435
    %613 = vrot.lane.b32.xlu0 %v610, 64
    %v614 = vpop.permute.xlu0 %613
    %v616 = vmul.f32 %v609, %v614
    %618 = vrot.lane.b32.xlu0 %v616, 32
    %v619 = vpop.permute.xlu0 %618
    %v621 = vadd.f32 %v611, %v619
    %v622 = vtanh.pop %v621
    %624 = vrot.lane.b32.xlu0 %v622, 64
    %v625 = vpop.permute.xlu0 %624
    %v627 = vmul.f32 %v609, %v625
    %v628 = vld [vmem:[#allocation9] sm:$0xff]
    %v629 = vld [vmem:[#allocation9 + $0x8] sm:$0xff]
    %v630 = vld [vmem:[#allocation9 + $0x10] sm:$0xff]
    %v631 = vld [vmem:[#allocation9 + $0x18] sm:$0xff]
    %v632 = vld [vmem:[#allocation9 + $0x20] sm:$0xff]
    %v633 = vld [vmem:[#allocation9 + $0x28] sm:$0xff]
    %v634 = vld [vmem:[#allocation9 + $0x30] sm:$0xff]
    %v635 = vld [vmem:[#allocation9 + $0x38] sm:$0xff]
    %v636 = vld [vmem:[%s6] sm:$0xff]
    %v637 = vld [vmem:[%s6 + $0x8] sm:$0xff]
    %v638 = vld [vmem:[%s6 + $0x10] sm:$0xff]
    %v639 = vld [vmem:[%s6 + $0x18] sm:$0xff]
    %v640 = vld [vmem:[%s6 + $0x20] sm:$0xff]
    %v641 = vld [vmem:[%s6 + $0x28] sm:$0xff]
    %v642 = vld [vmem:[%s6 + $0x30] sm:$0xff]
    %v643 = vld [vmem:[%s6 + $0x38] sm:$0xff]
    %v644 = vld [vmem:[%s6 + $0x40] sm:$0xff]
    %v645 = vld [vmem:[%s6 + $0x48] sm:$0xff]
    %v646 = vld [vmem:[%s6 + $0x50] sm:$0xff]
    %v647 = vld [vmem:[%s6 + $0x58] sm:$0xff]
    %v648 = vld [vmem:[%s6 + $0x60] sm:$0xff]
    %v649 = vld [vmem:[%s6 + $0x68] sm:$0xff]
    %v650 = vld [vmem:[%s6 + $0x70] sm:$0xff]
    %v651 = vld [vmem:[%s6 + $0x78] sm:$0xff]
    %v652 = vsel %vm280, %v575, 0
    %654 = vmatpush.msra.mxu0 0.0
    %655 = vmatpush.msra.mxu0 0.0
    %656 = vmatpush.msra.mxu0 0.0
    %657 = vmatpush.msra.mxu0 0.0
    %658 = vmatpush.msra.mxu0 0.0
    %659 = vmatpush.msra.mxu0 0.0
    %660 = vmatpush.msra.mxu0 0.0
    %661 = vmatpush.msra.mxu0 0.0
    %662 = vmatpush.msra.mxu0 %v650
    %663 = vmatpush.msra.mxu0 %v648
    %664 = vmatpush.msra.mxu0 %v646
    %665 = vmatpush.msra.mxu0 %v644
    %666 = vmatpush.msra.mxu0 %v642
    %667 = vmatpush.msra.mxu0 %v640
    %668 = vmatpush.msra.mxu0 %v638
    %669 = vmatpush.msra.mxu0 %v636
    %670 = vmatmul.f32.gmra.mxu0 %v652
    %v671 = vpop.f32.mrf.mxu0
    %v672 = vadd.f32 0.0, %v671
    %673 = vdwg.mxu0
    %674 = vmatpush.msra.mxu0 0.0
    %675 = vmatpush.msra.mxu0 0.0
    %676 = vmatpush.msra.mxu0 0.0
    %677 = vmatpush.msra.mxu0 0.0
    %678 = vmatpush.msra.mxu0 0.0
    %679 = vmatpush.msra.mxu0 0.0
    %680 = vmatpush.msra.mxu0 0.0
    %681 = vmatpush.msra.mxu0 0.0
    %682 = vmatpush.msra.mxu0 %v651
    %683 = vmatpush.msra.mxu0 %v649
    %684 = vmatpush.msra.mxu0 %v647
    %685 = vmatpush.msra.mxu0 %v645
    %686 = vmatpush.msra.mxu0 %v643
    %687 = vmatpush.msra.mxu0 %v641
    %688 = vmatpush.msra.mxu0 %v639
    %689 = vmatpush.msra.mxu0 %v637
    %690 = vmatmul.f32.gmra.mxu0 %v652
    %v691 = vpop.f32.mrf.mxu0
    %v692 = vadd.f32 0.0, %v691
    %693 = vdwg.mxu0
    %695 = vrot.lane.b32.xlu0 %v627, 32
    %v696 = vpop.permute.xlu0 %695
    %v697 = vsel %vm89, %v696, 0
    %699 = vmatpush.msra.mxu0 0.0
    %700 = vmatpush.msra.mxu0 0.0
    %701 = vmatpush.msra.mxu0 0.0
    %702 = vmatpush.msra.mxu0 0.0
    %703 = vmatpush.msra.mxu0 0.0
    %704 = vmatpush.msra.mxu0 0.0
    %705 = vmatpush.msra.mxu0 0.0
    %706 = vmatpush.msra.mxu0 0.0
    %707 = vmatpush.msra.mxu0 0.0
    %708 = vmatpush.msra.mxu0 0.0
    %709 = vmatpush.msra.mxu0 0.0
    %710 = vmatpush.msra.mxu0 0.0
    %711 = vmatpush.msra.mxu0 %v634
    %712 = vmatpush.msra.mxu0 %v632
    %713 = vmatpush.msra.mxu0 %v630
    %714 = vmatpush.msra.mxu0 %v628
    %715 = vmatmul.f32.gmra.mxu0 %v697
    %v716 = vpop.f32.mrf.mxu0
    %v717 = vadd.f32 %v672, %v716
    %718 = vdwg.mxu0
    %719 = vmatpush.msra.mxu0 0.0
    %720 = vmatpush.msra.mxu0 0.0
    %721 = vmatpush.msra.mxu0 0.0
    %722 = vmatpush.msra.mxu0 0.0
    %723 = vmatpush.msra.mxu0 0.0
    %724 = vmatpush.msra.mxu0 0.0
    %725 = vmatpush.msra.mxu0 0.0
    %726 = vmatpush.msra.mxu0 0.0
    %727 = vmatpush.msra.mxu0 0.0
    %728 = vmatpush.msra.mxu0 0.0
    %729 = vmatpush.msra.mxu0 0.0
    %730 = vmatpush.msra.mxu0 0.0
    %731 = vmatpush.msra.mxu0 %v635
    %732 = vmatpush.msra.mxu0 %v633
    %733 = vmatpush.msra.mxu0 %v631
    %734 = vmatpush.msra.mxu0 %v629
    %735 = vmatmul.f32.gmra.mxu0 %v697
    %v736 = vpop.f32.mrf.mxu0
    %v737 = vadd.f32 %v692, %v736
    %738 = vdwg.mxu0
    %v739 = vadd.f32 %v717, %v201
    %v740 = vadd.f32 %v737, %v202
    %v741 = vmul.f32 %v739, 0.5
    %v742 = vmul.f32 %v740, 0.5
    %v743 = vtanh.pop %v741
    %v744 = vtanh.pop %v742
    %v745 = vmul.f32 %v743, 0.5
    %v746 = vmul.f32 %v744, 0.5
    %v747 = vadd.f32 %v745, 0.5
    %v748 = vadd.f32 %v746, 0.5
    %v749 = vtanh.pop %v740
    %v750 = vmul.f32 %v747, %v570
    %v751 = vmul.f32 %v747, %v749
    %753 = vrot.lane.b32.xlu0 %v751, 64
    %v754 = vpop.permute.xlu0 %753
    %v756 = vadd.f32 %v750, %v754
    %v757 = vtanh.pop %v756
    %v758 = vmul.f32 %v748, %v757
    %760 = vrot.lane.b32.xlu0 %v758, 64
    %v761 = vpop.permute.xlu0 %760
    %s763 = scalar_lea.vmem [#allocation3], 16
    %764 = vst.msk [vmem:[%s763] sm:$0xff] %vm280, %v761
    %v765 = vld [vmem:[#allocation7] sm:$0xff]
    %v766 = vld [vmem:[#allocation7 + $0x8] sm:$0xff]
    %v767 = vld [vmem:[#allocation7 + $0x10] sm:$0xff]
    %v768 = vld [vmem:[#allocation7 + $0x18] sm:$0xff]
    %s769 = scalar_lea.vmem [#allocation2], 24
    %v770 = vld [vmem:[%s769] sm:$0xff]
    %771 = vmatpush.msra.mxu0 0.0
    %772 = vmatpush.msra.mxu0 0.0
    %773 = vmatpush.msra.mxu0 0.0
    %774 = vmatpush.msra.mxu0 0.0
    %775 = vmatpush.msra.mxu0 0.0
    %776 = vmatpush.msra.mxu0 0.0
    %777 = vmatpush.msra.mxu0 0.0
    %778 = vmatpush.msra.mxu0 0.0
    %779 = vmatpush.msra.mxu0 0.0
    %780 = vmatpush.msra.mxu0 0.0
    %781 = vmatpush.msra.mxu0 0.0
    %782 = vmatpush.msra.mxu0 0.0
    %783 = vmatpush.msra.mxu0 %v768
    %784 = vmatpush.msra.mxu0 %v767
    %785 = vmatpush.msra.mxu0 %v766
    %786 = vmatpush.msra.mxu0 %v765
    %787 = vmatmul.f32.gmra.mxu0 %v697
    %v788 = vpop.f32.mrf.mxu0
    %v789 = vadd.f32 0.0, %v788
    %790 = vdwg.mxu0
    %v791 = vadd.f32 %v770, %v789
    %v792 = vmul.f32 %v791, 0.5
    %v793 = vtanh.pop %v792
    %v794 = vmul.f32 %v793, 0.5
    %v795 = vadd.f32 %v794, 0.5
    %v796 = vtanh.pop %v791
    %v797 = vmul.f32 %v795, %v621
    %799 = vrot.lane.b32.xlu0 %v796, 64
    %v800 = vpop.permute.xlu0 %799
    %v802 = vmul.f32 %v795, %v800
    %804 = vrot.lane.b32.xlu0 %v802, 32
    %v805 = vpop.permute.xlu0 %804
    %v807 = vadd.f32 %v797, %v805
    %v808 = vtanh.pop %v807
    %810 = vrot.lane.b32.xlu0 %v808, 64
    %v811 = vpop.permute.xlu0 %810
    %v813 = vmul.f32 %v795, %v811
    %v814 = vld [vmem:[#allocation9] sm:$0xff]
    %v815 = vld [vmem:[#allocation9 + $0x8] sm:$0xff]
    %v816 = vld [vmem:[#allocation9 + $0x10] sm:$0xff]
    %v817 = vld [vmem:[#allocation9 + $0x18] sm:$0xff]
    %v818 = vld [vmem:[#allocation9 + $0x20] sm:$0xff]
    %v819 = vld [vmem:[#allocation9 + $0x28] sm:$0xff]
    %v820 = vld [vmem:[#allocation9 + $0x30] sm:$0xff]
    %v821 = vld [vmem:[#allocation9 + $0x38] sm:$0xff]
    %v822 = vld [vmem:[%s6] sm:$0xff]
    %v823 = vld [vmem:[%s6 + $0x8] sm:$0xff]
    %v824 = vld [vmem:[%s6 + $0x10] sm:$0xff]
    %v825 = vld [vmem:[%s6 + $0x18] sm:$0xff]
    %v826 = vld [vmem:[%s6 + $0x20] sm:$0xff]
    %v827 = vld [vmem:[%s6 + $0x28] sm:$0xff]
    %v828 = vld [vmem:[%s6 + $0x30] sm:$0xff]
    %v829 = vld [vmem:[%s6 + $0x38] sm:$0xff]
    %v830 = vld [vmem:[%s6 + $0x40] sm:$0xff]
    %v831 = vld [vmem:[%s6 + $0x48] sm:$0xff]
    %v832 = vld [vmem:[%s6 + $0x50] sm:$0xff]
    %v833 = vld [vmem:[%s6 + $0x58] sm:$0xff]
    %v834 = vld [vmem:[%s6 + $0x60] sm:$0xff]
    %v835 = vld [vmem:[%s6 + $0x68] sm:$0xff]
    %v836 = vld [vmem:[%s6 + $0x70] sm:$0xff]
    %v837 = vld [vmem:[%s6 + $0x78] sm:$0xff]
    %v838 = vsel %vm280, %v761, 0
    %840 = vmatpush.msra.mxu0 0.0
    %841 = vmatpush.msra.mxu0 0.0
    %842 = vmatpush.msra.mxu0 0.0
    %843 = vmatpush.msra.mxu0 0.0
    %844 = vmatpush.msra.mxu0 0.0
    %845 = vmatpush.msra.mxu0 0.0
    %846 = vmatpush.msra.mxu0 0.0
    %847 = vmatpush.msra.mxu0 0.0
    %848 = vmatpush.msra.mxu0 %v836
    %849 = vmatpush.msra.mxu0 %v834
    %850 = vmatpush.msra.mxu0 %v832
    %851 = vmatpush.msra.mxu0 %v830
    %852 = vmatpush.msra.mxu0 %v828
    %853 = vmatpush.msra.mxu0 %v826
    %854 = vmatpush.msra.mxu0 %v824
    %855 = vmatpush.msra.mxu0 %v822
    %856 = vmatmul.f32.gmra.mxu0 %v838
    %v857 = vpop.f32.mrf.mxu0
    %v858 = vadd.f32 0.0, %v857
    %859 = vdwg.mxu0
    %860 = vmatpush.msra.mxu0 0.0
    %861 = vmatpush.msra.mxu0 0.0
    %862 = vmatpush.msra.mxu0 0.0
    %863 = vmatpush.msra.mxu0 0.0
    %864 = vmatpush.msra.mxu0 0.0
    %865 = vmatpush.msra.mxu0 0.0
    %866 = vmatpush.msra.mxu0 0.0
    %867 = vmatpush.msra.mxu0 0.0
    %868 = vmatpush.msra.mxu0 %v837
    %869 = vmatpush.msra.mxu0 %v835
    %870 = vmatpush.msra.mxu0 %v833
    %871 = vmatpush.msra.mxu0 %v831
    %872 = vmatpush.msra.mxu0 %v829
    %873 = vmatpush.msra.mxu0 %v827
    %874 = vmatpush.msra.mxu0 %v825
    %875 = vmatpush.msra.mxu0 %v823
    %876 = vmatmul.f32.gmra.mxu0 %v838
    %v877 = vpop.f32.mrf.mxu0
    %v878 = vadd.f32 0.0, %v877
    %879 = vdwg.mxu0
    %881 = vrot.lane.b32.xlu0 %v813, 32
    %v882 = vpop.permute.xlu0 %881
    %v883 = vsel %vm89, %v882, 0
    %885 = vmatpush.msra.mxu0 0.0
    %886 = vmatpush.msra.mxu0 0.0
    %887 = vmatpush.msra.mxu0 0.0
    %888 = vmatpush.msra.mxu0 0.0
    %889 = vmatpush.msra.mxu0 0.0
    %890 = vmatpush.msra.mxu0 0.0
    %891 = vmatpush.msra.mxu0 0.0
    %892 = vmatpush.msra.mxu0 0.0
    %893 = vmatpush.msra.mxu0 0.0
    %894 = vmatpush.msra.mxu0 0.0
    %895 = vmatpush.msra.mxu0 0.0
    %896 = vmatpush.msra.mxu0 0.0
    %897 = vmatpush.msra.mxu0 %v820
    %898 = vmatpush.msra.mxu0 %v818
    %899 = vmatpush.msra.mxu0 %v816
    %900 = vmatpush.msra.mxu0 %v814
    %901 = vmatmul.f32.gmra.mxu0 %v883
    %v902 = vpop.f32.mrf.mxu0
    %v903 = vadd.f32 %v858, %v902
    %904 = vdwg.mxu0
    %905 = vmatpush.msra.mxu0 0.0
    %906 = vmatpush.msra.mxu0 0.0
    %907 = vmatpush.msra.mxu0 0.0
    %908 = vmatpush.msra.mxu0 0.0
    %909 = vmatpush.msra.mxu0 0.0
    %910 = vmatpush.msra.mxu0 0.0
    %911 = vmatpush.msra.mxu0 0.0
    %912 = vmatpush.msra.mxu0 0.0
    %913 = vmatpush.msra.mxu0 0.0
    %914 = vmatpush.msra.mxu0 0.0
    %915 = vmatpush.msra.mxu0 0.0
    %916 = vmatpush.msra.mxu0 0.0
    %917 = vmatpush.msra.mxu0 %v821
    %918 = vmatpush.msra.mxu0 %v819
    %919 = vmatpush.msra.mxu0 %v817
    %920 = vmatpush.msra.mxu0 %v815
    %921 = vmatmul.f32.gmra.mxu0 %v883
    %v922 = vpop.f32.mrf.mxu0
    %v923 = vadd.f32 %v878, %v922
    %924 = vdwg.mxu0
    %v925 = vadd.f32 %v903, %v201
    %v926 = vadd.f32 %v923, %v202
    %v927 = vmul.f32 %v925, 0.5
    %v928 = vmul.f32 %v926, 0.5
    %v929 = vtanh.pop %v927
    %v930 = vtanh.pop %v928
    %v931 = vmul.f32 %v929, 0.5
    %v932 = vmul.f32 %v930, 0.5
    %v933 = vadd.f32 %v931, 0.5
    %v934 = vadd.f32 %v932, 0.5
    %v935 = vtanh.pop %v926
    %v936 = vmul.f32 %v933, %v756
    %v937 = vmul.f32 %v933, %v935
    %939 = vrot.lane.b32.xlu0 %v937, 64
    %v940 = vpop.permute.xlu0 %939
    %v942 = vadd.f32 %v936, %v940
    %v943 = vtanh.pop %v942
    %v944 = vmul.f32 %v934, %v943
    %946 = vrot.lane.b32.xlu0 %v944, 64
    %v947 = vpop.permute.xlu0 %946
    %s949 = scalar_lea.vmem [#allocation3], 24
    %950 = vst.msk [vmem:[%s949] sm:$0xff] %vm280, %v947
    %v951 = vld [vmem:[#allocation7] sm:$0xff]
    %v952 = vld [vmem:[#allocation7 + $0x8] sm:$0xff]
    %v953 = vld [vmem:[#allocation7 + $0x10] sm:$0xff]
    %v954 = vld [vmem:[#allocation7 + $0x18] sm:$0xff]
    %s955 = scalar_lea.vmem [#allocation2], 32
    %v956 = vld [vmem:[%s955] sm:$0xff]
    %957 = vmatpush.msra.mxu0 0.0
    %958 = vmatpush.msra.mxu0 0.0
    %959 = vmatpush.msra.mxu0 0.0
    %960 = vmatpush.msra.mxu0 0.0
    %961 = vmatpush.msra.mxu0 0.0
    %962 = vmatpush.msra.mxu0 0.0
    %963 = vmatpush.msra.mxu0 0.0
    %964 = vmatpush.msra.mxu0 0.0
    %965 = vmatpush.msra.mxu0 0.0
    %966 = vmatpush.msra.mxu0 0.0
    %967 = vmatpush.msra.mxu0 0.0
    %968 = vmatpush.msra.mxu0 0.0
    %969 = vmatpush.msra.mxu0 %v954
    %970 = vmatpush.msra.mxu0 %v953
    %971 = vmatpush.msra.mxu0 %v952
    %972 = vmatpush.msra.mxu0 %v951
    %973 = vmatmul.f32.gmra.mxu0 %v883
    %v974 = vpop.f32.mrf.mxu0
    %v975 = vadd.f32 0.0, %v974
    %976 = vdwg.mxu0
    %v977 = vadd.f32 %v956, %v975
    %v978 = vmul.f32 %v977, 0.5
    %v979 = vtanh.pop %v978
    %v980 = vmul.f32 %v979, 0.5
    %v981 = vadd.f32 %v980, 0.5
    %v982 = vtanh.pop %v977
    %v983 = vmul.f32 %v981, %v807
    %985 = vrot.lane.b32.xlu0 %v982, 64
    %v986 = vpop.permute.xlu0 %985
    %v988 = vmul.f32 %v981, %v986
    %990 = vrot.lane.b32.xlu0 %v988, 32
    %v991 = vpop.permute.xlu0 %990
    %v993 = vadd.f32 %v983, %v991
    %v994 = vtanh.pop %v993
    %996 = vrot.lane.b32.xlu0 %v994, 64
    %v997 = vpop.permute.xlu0 %996
    %v999 = vmul.f32 %v981, %v997
    %v1000 = vld [vmem:[#allocation9] sm:$0xff]
    %v1001 = vld [vmem:[#allocation9 + $0x8] sm:$0xff]
    %v1002 = vld [vmem:[#allocation9 + $0x10] sm:$0xff]
    %v1003 = vld [vmem:[#allocation9 + $0x18] sm:$0xff]
    %v1004 = vld [vmem:[#allocation9 + $0x20] sm:$0xff]
    %v1005 = vld [vmem:[#allocation9 + $0x28] sm:$0xff]
    %v1006 = vld [vmem:[#allocation9 + $0x30] sm:$0xff]
    %v1007 = vld [vmem:[#allocation9 + $0x38] sm:$0xff]
    %v1008 = vld [vmem:[%s6] sm:$0xff]
    %v1009 = vld [vmem:[%s6 + $0x8] sm:$0xff]
    %v1010 = vld [vmem:[%s6 + $0x10] sm:$0xff]
    %v1011 = vld [vmem:[%s6 + $0x18] sm:$0xff]
    %v1012 = vld [vmem:[%s6 + $0x20] sm:$0xff]
    %v1013 = vld [vmem:[%s6 + $0x28] sm:$0xff]
    %v1014 = vld [vmem:[%s6 + $0x30] sm:$0xff]
    %v1015 = vld [vmem:[%s6 + $0x38] sm:$0xff]
    %v1016 = vld [vmem:[%s6 + $0x40] sm:$0xff]
    %v1017 = vld [vmem:[%s6 + $0x48] sm:$0xff]
    %v1018 = vld [vmem:[%s6 + $0x50] sm:$0xff]
    %v1019 = vld [vmem:[%s6 + $0x58] sm:$0xff]
    %v1020 = vld [vmem:[%s6 + $0x60] sm:$0xff]
    %v1021 = vld [vmem:[%s6 + $0x68] sm:$0xff]
    %v1022 = vld [vmem:[%s6 + $0x70] sm:$0xff]
    %v1023 = vld [vmem:[%s6 + $0x78] sm:$0xff]
    %v1024 = vsel %vm280, %v947, 0
    %1026 = vmatpush.msra.mxu0 0.0
    %1027 = vmatpush.msra.mxu0 0.0
    %1028 = vmatpush.msra.mxu0 0.0
    %1029 = vmatpush.msra.mxu0 0.0
    %1030 = vmatpush.msra.mxu0 0.0
    %1031 = vmatpush.msra.mxu0 0.0
    %1032 = vmatpush.msra.mxu0 0.0
    %1033 = vmatpush.msra.mxu0 0.0
    %1034 = vmatpush.msra.mxu0 %v1022
    %1035 = vmatpush.msra.mxu0 %v1020
    %1036 = vmatpush.msra.mxu0 %v1018
    %1037 = vmatpush.msra.mxu0 %v1016
    %1038 = vmatpush.msra.mxu0 %v1014
    %1039 = vmatpush.msra.mxu0 %v1012
    %1040 = vmatpush.msra.mxu0 %v1010
    %1041 = vmatpush.msra.mxu0 %v1008
    %1042 = vmatmul.f32.gmra.mxu0 %v1024
    %v1043 = vpop.f32.mrf.mxu0
    %v1044 = vadd.f32 0.0, %v1043
    %1045 = vdwg.mxu0
    %1046 = vmatpush.msra.mxu0 0.0
    %1047 = vmatpush.msra.mxu0 0.0
    %1048 = vmatpush.msra.mxu0 0.0
    %1049 = vmatpush.msra.mxu0 0.0
    %1050 = vmatpush.msra.mxu0 0.0
    %1051 = vmatpush.msra.mxu0 0.0
    %1052 = vmatpush.msra.mxu0 0.0
    %1053 = vmatpush.msra.mxu0 0.0
    %1054 = vmatpush.msra.mxu0 %v1023
    %1055 = vmatpush.msra.mxu0 %v1021
    %1056 = vmatpush.msra.mxu0 %v1019
    %1057 = vmatpush.msra.mxu0 %v1017
    %1058 = vmatpush.msra.mxu0 %v1015
    %1059 = vmatpush.msra.mxu0 %v1013
    %1060 = vmatpush.msra.mxu0 %v1011
    %1061 = vmatpush.msra.mxu0 %v1009
    %1062 = vmatmul.f32.gmra.mxu0 %v1024
    %v1063 = vpop.f32.mrf.mxu0
    %v1064 = vadd.f32 0.0, %v1063
    %1065 = vdwg.mxu0
    %1067 = vrot.lane.b32.xlu0 %v999, 32
    %v1068 = vpop.permute.xlu0 %1067
    %v1069 = vsel %vm89, %v1068, 0
    %1071 = vmatpush.msra.mxu0 0.0
    %1072 = vmatpush.msra.mxu0 0.0
    %1073 = vmatpush.msra.mxu0 0.0
    %1074 = vmatpush.msra.mxu0 0.0
    %1075 = vmatpush.msra.mxu0 0.0
    %1076 = vmatpush.msra.mxu0 0.0
    %1077 = vmatpush.msra.mxu0 0.0
    %1078 = vmatpush.msra.mxu0 0.0
    %1079 = vmatpush.msra.mxu0 0.0
    %1080 = vmatpush.msra.mxu0 0.0
    %1081 = vmatpush.msra.mxu0 0.0
    %1082 = vmatpush.msra.mxu0 0.0
    %1083 = vmatpush.msra.mxu0 %v1006
    %1084 = vmatpush.msra.mxu0 %v1004
    %1085 = vmatpush.msra.mxu0 %v1002
    %1086 = vmatpush.msra.mxu0 %v1000
    %1087 = vmatmul.f32.gmra.mxu0 %v1069
    %v1088 = vpop.f32.mrf.mxu0
    %v1089 = vadd.f32 %v1044, %v1088
    %1090 = vdwg.mxu0
    %1091 = vmatpush.msra.mxu0 0.0
    %1092 = vmatpush.msra.mxu0 0.0
    %1093 = vmatpush.msra.mxu0 0.0
    %1094 = vmatpush.msra.mxu0 0.0
    %1095 = vmatpush.msra.mxu0 0.0
    %1096 = vmatpush.msra.mxu0 0.0
    %1097 = vmatpush.msra.mxu0 0.0
    %1098 = vmatpush.msra.mxu0 0.0
    %1099 = vmatpush.msra.mxu0 0.0
    %1100 = vmatpush.msra.mxu0 0.0
    %1101 = vmatpush.msra.mxu0 0.0
    %1102 = vmatpush.msra.mxu0 0.0
    %1103 = vmatpush.msra.mxu0 %v1007
    %1104 = vmatpush.msra.mxu0 %v1005
    %1105 = vmatpush.msra.mxu0 %v1003
    %1106 = vmatpush.msra.mxu0 %v1001
    %1107 = vmatmul.f32.gmra.mxu0 %v1069
    %v1108 = vpop.f32.mrf.mxu0
    %v1109 = vadd.f32 %v1064, %v1108
    %1110 = vdwg.mxu0
    %v1111 = vadd.f32 %v1089, %v201
    %v1112 = vadd.f32 %v1109, %v202
    %v1113 = vmul.f32 %v1111, 0.5
    %v1114 = vmul.f32 %v1112, 0.5
    %v1115 = vtanh.pop %v1113
    %v1116 = vtanh.pop %v1114
    %v1117 = vmul.f32 %v1115, 0.5
    %v1118 = vmul.f32 %v1116, 0.5
    %v1119 = vadd.f32 %v1117, 0.5
    %v1120 = vadd.f32 %v1118, 0.5
    %v1121 = vtanh.pop %v1112
    %v1122 = vmul.f32 %v1119, %v942
    %v1123 = vmul.f32 %v1119, %v1121
    %1125 = vrot.lane.b32.xlu0 %v1123, 64
    %v1126 = vpop.permute.xlu0 %1125
    %v1128 = vadd.f32 %v1122, %v1126
    %v1129 = vtanh.pop %v1128
    %v1130 = vmul.f32 %v1120, %v1129
    %1132 = vrot.lane.b32.xlu0 %v1130, 64
    %v1133 = vpop.permute.xlu0 %1132
    %s1135 = scalar_lea.vmem [#allocation3], 32
    %1136 = vst.msk [vmem:[%s1135] sm:$0xff] %vm280, %v1133
    %v1137 = vld [vmem:[#allocation7] sm:$0xff]
    %v1138 = vld [vmem:[#allocation7 + $0x8] sm:$0xff]
    %v1139 = vld [vmem:[#allocation7 + $0x10] sm:$0xff]
    %v1140 = vld [vmem:[#allocation7 + $0x18] sm:$0xff]
    %s1141 = scalar_lea.vmem [#allocation2], 40
    %v1142 = vld [vmem:[%s1141] sm:$0xff]
    %1143 = vmatpush.msra.mxu0 0.0
    %1144 = vmatpush.msra.mxu0 0.0
    %1145 = vmatpush.msra.mxu0 0.0
    %1146 = vmatpush.msra.mxu0 0.0
    %1147 = vmatpush.msra.mxu0 0.0
    %1148 = vmatpush.msra.mxu0 0.0
    %1149 = vmatpush.msra.mxu0 0.0
    %1150 = vmatpush.msra.mxu0 0.0
    %1151 = vmatpush.msra.mxu0 0.0
    %1152 = vmatpush.msra.mxu0 0.0
    %1153 = vmatpush.msra.mxu0 0.0
    %1154 = vmatpush.msra.mxu0 0.0
    %1155 = vmatpush.msra.mxu0 %v1140
    %1156 = vmatpush.msra.mxu0 %v1139
    %1157 = vmatpush.msra.mxu0 %v1138
    %1158 = vmatpush.msra.mxu0 %v1137
    %1159 = vmatmul.f32.gmra.mxu0 %v1069
    %v1160 = vpop.f32.mrf.mxu0
    %v1161 = vadd.f32 0.0, %v1160
    %1162 = vdwg.mxu0
    %v1163 = vadd.f32 %v1142, %v1161
    %v1164 = vmul.f32 %v1163, 0.5
    %v1165 = vtanh.pop %v1164
    %v1166 = vmul.f32 %v1165, 0.5
    %v1167 = vadd.f32 %v1166, 0.5
    %v1168 = vtanh.pop %v1163
    %v1169 = vmul.f32 %v1167, %v993
    %1171 = vrot.lane.b32.xlu0 %v1168, 64
    %v1172 = vpop.permute.xlu0 %1171
    %v1174 = vmul.f32 %v1167, %v1172
    %1176 = vrot.lane.b32.xlu0 %v1174, 32
    %v1177 = vpop.permute.xlu0 %1176
    %v1179 = vadd.f32 %v1169, %v1177
    %v1180 = vtanh.pop %v1179
    %1182 = vrot.lane.b32.xlu0 %v1180, 64
    %v1183 = vpop.permute.xlu0 %1182
    %v1185 = vmul.f32 %v1167, %v1183
    %v1186 = vld [vmem:[#allocation9] sm:$0xff]
    %v1187 = vld [vmem:[#allocation9 + $0x8] sm:$0xff]
    %v1188 = vld [vmem:[#allocation9 + $0x10] sm:$0xff]
    %v1189 = vld [vmem:[#allocation9 + $0x18] sm:$0xff]
    %v1190 = vld [vmem:[#allocation9 + $0x20] sm:$0xff]
    %v1191 = vld [vmem:[#allocation9 + $0x28] sm:$0xff]
    %v1192 = vld [vmem:[#allocation9 + $0x30] sm:$0xff]
    %v1193 = vld [vmem:[#allocation9 + $0x38] sm:$0xff]
    %v1194 = vld [vmem:[%s6] sm:$0xff]
    %v1195 = vld [vmem:[%s6 + $0x8] sm:$0xff]
    %v1196 = vld [vmem:[%s6 + $0x10] sm:$0xff]
    %v1197 = vld [vmem:[%s6 + $0x18] sm:$0xff]
    %v1198 = vld [vmem:[%s6 + $0x20] sm:$0xff]
    %v1199 = vld [vmem:[%s6 + $0x28] sm:$0xff]
    %v1200 = vld [vmem:[%s6 + $0x30] sm:$0xff]
    %v1201 = vld [vmem:[%s6 + $0x38] sm:$0xff]
    %v1202 = vld [vmem:[%s6 + $0x40] sm:$0xff]
    %v1203 = vld [vmem:[%s6 + $0x48] sm:$0xff]
    %v1204 = vld [vmem:[%s6 + $0x50] sm:$0xff]
    %v1205 = vld [vmem:[%s6 + $0x58] sm:$0xff]
    %v1206 = vld [vmem:[%s6 + $0x60] sm:$0xff]
    %v1207 = vld [vmem:[%s6 + $0x68] sm:$0xff]
    %v1208 = vld [vmem:[%s6 + $0x70] sm:$0xff]
    %v1209 = vld [vmem:[%s6 + $0x78] sm:$0xff]
    %v1210 = vsel %vm280, %v1133, 0
    %1212 = vmatpush.msra.mxu0 0.0
    %1213 = vmatpush.msra.mxu0 0.0
    %1214 = vmatpush.msra.mxu0 0.0
    %1215 = vmatpush.msra.mxu0 0.0
    %1216 = vmatpush.msra.mxu0 0.0
    %1217 = vmatpush.msra.mxu0 0.0
    %1218 = vmatpush.msra.mxu0 0.0
    %1219 = vmatpush.msra.mxu0 0.0
    %1220 = vmatpush.msra.mxu0 %v1208
    %1221 = vmatpush.msra.mxu0 %v1206
    %1222 = vmatpush.msra.mxu0 %v1204
    %1223 = vmatpush.msra.mxu0 %v1202
    %1224 = vmatpush.msra.mxu0 %v1200
    %1225 = vmatpush.msra.mxu0 %v1198
    %1226 = vmatpush.msra.mxu0 %v1196
    %1227 = vmatpush.msra.mxu0 %v1194
    %1228 = vmatmul.f32.gmra.mxu0 %v1210
    %v1229 = vpop.f32.mrf.mxu0
    %v1230 = vadd.f32 0.0, %v1229
    %1231 = vdwg.mxu0
    %1232 = vmatpush.msra.mxu0 0.0
    %1233 = vmatpush.msra.mxu0 0.0
    %1234 = vmatpush.msra.mxu0 0.0
    %1235 = vmatpush.msra.mxu0 0.0
    %1236 = vmatpush.msra.mxu0 0.0
    %1237 = vmatpush.msra.mxu0 0.0
    %1238 = vmatpush.msra.mxu0 0.0
    %1239 = vmatpush.msra.mxu0 0.0
    %1240 = vmatpush.msra.mxu0 %v1209
    %1241 = vmatpush.msra.mxu0 %v1207
    %1242 = vmatpush.msra.mxu0 %v1205
    %1243 = vmatpush.msra.mxu0 %v1203
    %1244 = vmatpush.msra.mxu0 %v1201
    %1245 = vmatpush.msra.mxu0 %v1199
    %1246 = vmatpush.msra.mxu0 %v1197
    %1247 = vmatpush.msra.mxu0 %v1195
    %1248 = vmatmul.f32.gmra.mxu0 %v1210
    %v1249 = vpop.f32.mrf.mxu0
    %v1250 = vadd.f32 0.0, %v1249
    %1251 = vdwg.mxu0
    %1253 = vrot.lane.b32.xlu0 %v1185, 32
    %v1254 = vpop.permute.xlu0 %1253
    %v1255 = vsel %vm89, %v1254, 0
    %1257 = vmatpush.msra.mxu0 0.0
    %1258 = vmatpush.msra.mxu0 0.0
    %1259 = vmatpush.msra.mxu0 0.0
    %1260 = vmatpush.msra.mxu0 0.0
    %1261 = vmatpush.msra.mxu0 0.0
    %1262 = vmatpush.msra.mxu0 0.0
    %1263 = vmatpush.msra.mxu0 0.0
    %1264 = vmatpush.msra.mxu0 0.0
    %1265 = vmatpush.msra.mxu0 0.0
    %1266 = vmatpush.msra.mxu0 0.0
    %1267 = vmatpush.msra.mxu0 0.0
    %1268 = vmatpush.msra.mxu0 0.0
    %1269 = vmatpush.msra.mxu0 %v1192
    %1270 = vmatpush.msra.mxu0 %v1190
    %1271 = vmatpush.msra.mxu0 %v1188
    %1272 = vmatpush.msra.mxu0 %v1186
    %1273 = vmatmul.f32.gmra.mxu0 %v1255
    %v1274 = vpop.f32.mrf.mxu0
    %v1275 = vadd.f32 %v1230, %v1274
    %1276 = vdwg.mxu0
    %1277 = vmatpush.msra.mxu0 0.0
    %1278 = vmatpush.msra.mxu0 0.0
    %1279 = vmatpush.msra.mxu0 0.0
    %1280 = vmatpush.msra.mxu0 0.0
    %1281 = vmatpush.msra.mxu0 0.0
    %1282 = vmatpush.msra.mxu0 0.0
    %1283 = vmatpush.msra.mxu0 0.0
    %1284 = vmatpush.msra.mxu0 0.0
    %1285 = vmatpush.msra.mxu0 0.0
    %1286 = vmatpush.msra.mxu0 0.0
    %1287 = vmatpush.msra.mxu0 0.0
    %1288 = vmatpush.msra.mxu0 0.0
    %1289 = vmatpush.msra.mxu0 %v1193
    %1290 = vmatpush.msra.mxu0 %v1191
    %1291 = vmatpush.msra.mxu0 %v1189
    %1292 = vmatpush.msra.mxu0 %v1187
    %1293 = vmatmul.f32.gmra.mxu0 %v1255
    %v1294 = vpop.f32.mrf.mxu0
    %v1295 = vadd.f32 %v1250, %v1294
    %1296 = vdwg.mxu0
    %v1297 = vadd.f32 %v1275, %v201
    %v1298 = vadd.f32 %v1295, %v202
    %v1299 = vmul.f32 %v1297, 0.5
    %v1300 = vmul.f32 %v1298, 0.5
    %v1301 = vtanh.pop %v1299
    %v1302 = vtanh.pop %v1300
    %v1303 = vmul.f32 %v1301, 0.5
    %v1304 = vmul.f32 %v1302, 0.5
    %v1305 = vadd.f32 %v1303, 0.5
    %v1306 = vadd.f32 %v1304, 0.5
    %v1307 = vtanh.pop %v1298
    %v1308 = vmul.f32 %v1305, %v1128
    %v1309 = vmul.f32 %v1305, %v1307
    %1311 = vrot.lane.b32.xlu0 %v1309, 64
    %v1312 = vpop.permute.xlu0 %1311
    %v1314 = vadd.f32 %v1308, %v1312
    %v1315 = vtanh.pop %v1314
    %v1316 = vmul.f32 %v1306, %v1315
    %1318 = vrot.lane.b32.xlu0 %v1316, 64
    %v1319 = vpop.permute.xlu0 %1318
    %s1321 = scalar_lea.vmem [#allocation3], 40
    %1322 = vst.msk [vmem:[%s1321] sm:$0xff] %vm280, %v1319
    %v1323 = vld [vmem:[#allocation7] sm:$0xff]
    %v1324 = vld [vmem:[#allocation7 + $0x8] sm:$0xff]
    %v1325 = vld [vmem:[#allocation7 + $0x10] sm:$0xff]
    %v1326 = vld [vmem:[#allocation7 + $0x18] sm:$0xff]
    %s1327 = scalar_lea.vmem [#allocation2], 48
    %v1328 = vld [vmem:[%s1327] sm:$0xff]
    %1329 = vmatpush.msra.mxu0 0.0
    %1330 = vmatpush.msra.mxu0 0.0
    %1331 = vmatpush.msra.mxu0 0.0
    %1332 = vmatpush.msra.mxu0 0.0
    %1333 = vmatpush.msra.mxu0 0.0
    %1334 = vmatpush.msra.mxu0 0.0
    %1335 = vmatpush.msra.mxu0 0.0
    %1336 = vmatpush.msra.mxu0 0.0
    %1337 = vmatpush.msra.mxu0 0.0
    %1338 = vmatpush.msra.mxu0 0.0
    %1339 = vmatpush.msra.mxu0 0.0
    %1340 = vmatpush.msra.mxu0 0.0
    %1341 = vmatpush.msra.mxu0 %v1326
    %1342 = vmatpush.msra.mxu0 %v1325
    %1343 = vmatpush.msra.mxu0 %v1324
    %1344 = vmatpush.msra.mxu0 %v1323
    %1345 = vmatmul.f32.gmra.mxu0 %v1255
    %v1346 = vpop.f32.mrf.mxu0
    %v1347 = vadd.f32 0.0, %v1346
    %1348 = vdwg.mxu0
    %v1349 = vadd.f32 %v1328, %v1347
    %v1350 = vmul.f32 %v1349, 0.5
    %v1351 = vtanh.pop %v1350
    %v1352 = vmul.f32 %v1351, 0.5
    %v1353 = vadd.f32 %v1352, 0.5
    %v1354 = vtanh.pop %v1349
    %v1355 = vmul.f32 %v1353, %v1179
    %1357 = vrot.lane.b32.xlu0 %v1354, 64
    %v1358 = vpop.permute.xlu0 %1357
    %v1360 = vmul.f32 %v1353, %v1358
    %1362 = vrot.lane.b32.xlu0 %v1360, 32
    %v1363 = vpop.permute.xlu0 %1362
    %v1365 = vadd.f32 %v1355, %v1363
    %v1366 = vtanh.pop %v1365
    %1368 = vrot.lane.b32.xlu0 %v1366, 64
    %v1369 = vpop.permute.xlu0 %1368
    %v1371 = vmul.f32 %v1353, %v1369
    %v1372 = vld [vmem:[#allocation9] sm:$0xff]
    %v1373 = vld [vmem:[#allocation9 + $0x8] sm:$0xff]
    %v1374 = vld [vmem:[#allocation9 + $0x10] sm:$0xff]
    %v1375 = vld [vmem:[#allocation9 + $0x18] sm:$0xff]
    %v1376 = vld [vmem:[#allocation9 + $0x20] sm:$0xff]
    %v1377 = vld [vmem:[#allocation9 + $0x28] sm:$0xff]
    %v1378 = vld [vmem:[#allocation9 + $0x30] sm:$0xff]
    %v1379 = vld [vmem:[#allocation9 + $0x38] sm:$0xff]
    %v1380 = vld [vmem:[%s6] sm:$0xff]
    %v1381 = vld [vmem:[%s6 + $0x8] sm:$0xff]
    %v1382 = vld [vmem:[%s6 + $0x10] sm:$0xff]
    %v1383 = vld [vmem:[%s6 + $0x18] sm:$0xff]
    %v1384 = vld [vmem:[%s6 + $0x20] sm:$0xff]
    %v1385 = vld [vmem:[%s6 + $0x28] sm:$0xff]
    %v1386 = vld [vmem:[%s6 + $0x30] sm:$0xff]
    %v1387 = vld [vmem:[%s6 + $0x38] sm:$0xff]
    %v1388 = vld [vmem:[%s6 + $0x40] sm:$0xff]
    %v1389 = vld [vmem:[%s6 + $0x48] sm:$0xff]
    %v1390 = vld [vmem:[%s6 + $0x50] sm:$0xff]
    %v1391 = vld [vmem:[%s6 + $0x58] sm:$0xff]
    %v1392 = vld [vmem:[%s6 + $0x60] sm:$0xff]
    %v1393 = vld [vmem:[%s6 + $0x68] sm:$0xff]
    %v1394 = vld [vmem:[%s6 + $0x70] sm:$0xff]
    %v1395 = vld [vmem:[%s6 + $0x78] sm:$0xff]
    %v1396 = vsel %vm280, %v1319, 0
    %1398 = vmatpush.msra.mxu0 0.0
    %1399 = vmatpush.msra.mxu0 0.0
    %1400 = vmatpush.msra.mxu0 0.0
    %1401 = vmatpush.msra.mxu0 0.0
    %1402 = vmatpush.msra.mxu0 0.0
    %1403 = vmatpush.msra.mxu0 0.0
    %1404 = vmatpush.msra.mxu0 0.0
    %1405 = vmatpush.msra.mxu0 0.0
    %1406 = vmatpush.msra.mxu0 %v1394
    %1407 = vmatpush.msra.mxu0 %v1392
    %1408 = vmatpush.msra.mxu0 %v1390
    %1409 = vmatpush.msra.mxu0 %v1388
    %1410 = vmatpush.msra.mxu0 %v1386
    %1411 = vmatpush.msra.mxu0 %v1384
    %1412 = vmatpush.msra.mxu0 %v1382
    %1413 = vmatpush.msra.mxu0 %v1380
    %1414 = vmatmul.f32.gmra.mxu0 %v1396
    %v1415 = vpop.f32.mrf.mxu0
    %v1416 = vadd.f32 0.0, %v1415
    %1417 = vdwg.mxu0
    %1418 = vmatpush.msra.mxu0 0.0
    %1419 = vmatpush.msra.mxu0 0.0
    %1420 = vmatpush.msra.mxu0 0.0
    %1421 = vmatpush.msra.mxu0 0.0
    %1422 = vmatpush.msra.mxu0 0.0
    %1423 = vmatpush.msra.mxu0 0.0
    %1424 = vmatpush.msra.mxu0 0.0
    %1425 = vmatpush.msra.mxu0 0.0
    %1426 = vmatpush.msra.mxu0 %v1395
    %1427 = vmatpush.msra.mxu0 %v1393
    %1428 = vmatpush.msra.mxu0 %v1391
    %1429 = vmatpush.msra.mxu0 %v1389
    %1430 = vmatpush.msra.mxu0 %v1387
    %1431 = vmatpush.msra.mxu0 %v1385
    %1432 = vmatpush.msra.mxu0 %v1383
    %1433 = vmatpush.msra.mxu0 %v1381
    %1434 = vmatmul.f32.gmra.mxu0 %v1396
    %v1435 = vpop.f32.mrf.mxu0
    %v1436 = vadd.f32 0.0, %v1435
    %1437 = vdwg.mxu0
    %1439 = vrot.lane.b32.xlu0 %v1371, 32
    %v1440 = vpop.permute.xlu0 %1439
    %v1441 = vsel %vm89, %v1440, 0
    %1443 = vmatpush.msra.mxu0 0.0
    %1444 = vmatpush.msra.mxu0 0.0
    %1445 = vmatpush.msra.mxu0 0.0
    %1446 = vmatpush.msra.mxu0 0.0
    %1447 = vmatpush.msra.mxu0 0.0
    %1448 = vmatpush.msra.mxu0 0.0
    %1449 = vmatpush.msra.mxu0 0.0
    %1450 = vmatpush.msra.mxu0 0.0
    %1451 = vmatpush.msra.mxu0 0.0
    %1452 = vmatpush.msra.mxu0 0.0
    %1453 = vmatpush.msra.mxu0 0.0
    %1454 = vmatpush.msra.mxu0 0.0
    %1455 = vmatpush.msra.mxu0 %v1378
    %1456 = vmatpush.msra.mxu0 %v1376
    %1457 = vmatpush.msra.mxu0 %v1374
    %1458 = vmatpush.msra.mxu0 %v1372
    %1459 = vmatmul.f32.gmra.mxu0 %v1441
    %v1460 = vpop.f32.mrf.mxu0
    %v1461 = vadd.f32 %v1416, %v1460
    %1462 = vdwg.mxu0
    %1463 = vmatpush.msra.mxu0 0.0
    %1464 = vmatpush.msra.mxu0 0.0
    %1465 = vmatpush.msra.mxu0 0.0
    %1466 = vmatpush.msra.mxu0 0.0
    %1467 = vmatpush.msra.mxu0 0.0
    %1468 = vmatpush.msra.mxu0 0.0
    %1469 = vmatpush.msra.mxu0 0.0
    %1470 = vmatpush.msra.mxu0 0.0
    %1471 = vmatpush.msra.mxu0 0.0
    %1472 = vmatpush.msra.mxu0 0.0
    %1473 = vmatpush.msra.mxu0 0.0
    %1474 = vmatpush.msra.mxu0 0.0
    %1475 = vmatpush.msra.mxu0 %v1379
    %1476 = vmatpush.msra.mxu0 %v1377
    %1477 = vmatpush.msra.mxu0 %v1375
    %1478 = vmatpush.msra.mxu0 %v1373
    %1479 = vmatmul.f32.gmra.mxu0 %v1441
    %v1480 = vpop.f32.mrf.mxu0
    %v1481 = vadd.f32 %v1436, %v1480
    %1482 = vdwg.mxu0
    %v1483 = vadd.f32 %v1461, %v201
    %v1484 = vadd.f32 %v1481, %v202
    %v1485 = vmul.f32 %v1483, 0.5
    %v1486 = vmul.f32 %v1484, 0.5
    %v1487 = vtanh.pop %v1485
    %v1488 = vtanh.pop %v1486
    %v1489 = vmul.f32 %v1487, 0.5
    %v1490 = vmul.f32 %v1488, 0.5
    %v1491 = vadd.f32 %v1489, 0.5
    %v1492 = vadd.f32 %v1490, 0.5
    %v1493 = vtanh.pop %v1484
    %v1494 = vmul.f32 %v1491, %v1314
    %v1495 = vmul.f32 %v1491, %v1493
    %1497 = vrot.lane.b32.xlu0 %v1495, 64
    %v1498 = vpop.permute.xlu0 %1497
    %v1500 = vadd.f32 %v1494, %v1498
    %v1501 = vtanh.pop %v1500
    %v1502 = vmul.f32 %v1492, %v1501
    %1504 = vrot.lane.b32.xlu0 %v1502, 64
    %v1505 = vpop.permute.xlu0 %1504
    %s1507 = scalar_lea.vmem [#allocation3], 48
    %1508 = vst.msk [vmem:[%s1507] sm:$0xff] %vm280, %v1505
    %v1509 = vld [vmem:[#allocation7] sm:$0xff]
    %v1510 = vld [vmem:[#allocation7 + $0x8] sm:$0xff]
    %v1511 = vld [vmem:[#allocation7 + $0x10] sm:$0xff]
    %v1512 = vld [vmem:[#allocation7 + $0x18] sm:$0xff]
    %s1513 = scalar_lea.vmem [#allocation2], 56
    %v1514 = vld [vmem:[%s1513] sm:$0xff]
    %1515 = vmatpush.msra.mxu0 0.0
    %1516 = vmatpush.msra.mxu0 0.0
    %1517 = vmatpush.msra.mxu0 0.0
    %1518 = vmatpush.msra.mxu0 0.0
    %1519 = vmatpush.msra.mxu0 0.0
    %1520 = vmatpush.msra.mxu0 0.0
    %1521 = vmatpush.msra.mxu0 0.0
    %1522 = vmatpush.msra.mxu0 0.0
    %1523 = vmatpush.msra.mxu0 0.0
    %1524 = vmatpush.msra.mxu0 0.0
    %1525 = vmatpush.msra.mxu0 0.0
    %1526 = vmatpush.msra.mxu0 0.0
    %1527 = vmatpush.msra.mxu0 %v1512
    %1528 = vmatpush.msra.mxu0 %v1511
    %1529 = vmatpush.msra.mxu0 %v1510
    %1530 = vmatpush.msra.mxu0 %v1509
    %1531 = vmatmul.f32.gmra.mxu0 %v1441
    %v1532 = vpop.f32.mrf.mxu0
    %v1533 = vadd.f32 0.0, %v1532
    %1534 = vdwg.mxu0
    %v1535 = vadd.f32 %v1514, %v1533
    %v1536 = vmul.f32 %v1535, 0.5
    %v1537 = vtanh.pop %v1536
    %v1538 = vmul.f32 %v1537, 0.5
    %v1539 = vadd.f32 %v1538, 0.5
    %v1540 = vtanh.pop %v1535
    %v1541 = vmul.f32 %v1539, %v1365
    %1543 = vrot.lane.b32.xlu0 %v1540, 64
    %v1544 = vpop.permute.xlu0 %1543
    %v1546 = vmul.f32 %v1539, %v1544
    %1548 = vrot.lane.b32.xlu0 %v1546, 32
    %v1549 = vpop.permute.xlu0 %1548
    %v1551 = vadd.f32 %v1541, %v1549
    %v1552 = vtanh.pop %v1551
    %1554 = vrot.lane.b32.xlu0 %v1552, 64
    %v1555 = vpop.permute.xlu0 %1554
    %v1557 = vmul.f32 %v1539, %v1555
    %v1558 = vld [vmem:[#allocation9] sm:$0xff]
    %v1559 = vld [vmem:[#allocation9 + $0x8] sm:$0xff]
    %v1560 = vld [vmem:[#allocation9 + $0x10] sm:$0xff]
    %v1561 = vld [vmem:[#allocation9 + $0x18] sm:$0xff]
    %v1562 = vld [vmem:[#allocation9 + $0x20] sm:$0xff]
    %v1563 = vld [vmem:[#allocation9 + $0x28] sm:$0xff]
    %v1564 = vld [vmem:[#allocation9 + $0x30] sm:$0xff]
    %v1565 = vld [vmem:[#allocation9 + $0x38] sm:$0xff]
    %v1566 = vld [vmem:[%s6] sm:$0xff]
    %v1567 = vld [vmem:[%s6 + $0x8] sm:$0xff]
    %v1568 = vld [vmem:[%s6 + $0x10] sm:$0xff]
    %v1569 = vld [vmem:[%s6 + $0x18] sm:$0xff]
    %v1570 = vld [vmem:[%s6 + $0x20] sm:$0xff]
    %v1571 = vld [vmem:[%s6 + $0x28] sm:$0xff]
    %v1572 = vld [vmem:[%s6 + $0x30] sm:$0xff]
    %v1573 = vld [vmem:[%s6 + $0x38] sm:$0xff]
    %v1574 = vld [vmem:[%s6 + $0x40] sm:$0xff]
    %v1575 = vld [vmem:[%s6 + $0x48] sm:$0xff]
    %v1576 = vld [vmem:[%s6 + $0x50] sm:$0xff]
    %v1577 = vld [vmem:[%s6 + $0x58] sm:$0xff]
    %v1578 = vld [vmem:[%s6 + $0x60] sm:$0xff]
    %v1579 = vld [vmem:[%s6 + $0x68] sm:$0xff]
    %v1580 = vld [vmem:[%s6 + $0x70] sm:$0xff]
    %v1581 = vld [vmem:[%s6 + $0x78] sm:$0xff]
    %v1582 = vsel %vm280, %v1505, 0
    %1584 = vmatpush.msra.mxu0 0.0
    %1585 = vmatpush.msra.mxu0 0.0
    %1586 = vmatpush.msra.mxu0 0.0
    %1587 = vmatpush.msra.mxu0 0.0
    %1588 = vmatpush.msra.mxu0 0.0
    %1589 = vmatpush.msra.mxu0 0.0
    %1590 = vmatpush.msra.mxu0 0.0
    %1591 = vmatpush.msra.mxu0 0.0
    %1592 = vmatpush.msra.mxu0 %v1580
    %1593 = vmatpush.msra.mxu0 %v1578
    %1594 = vmatpush.msra.mxu0 %v1576
    %1595 = vmatpush.msra.mxu0 %v1574
    %1596 = vmatpush.msra.mxu0 %v1572
    %1597 = vmatpush.msra.mxu0 %v1570
    %1598 = vmatpush.msra.mxu0 %v1568
    %1599 = vmatpush.msra.mxu0 %v1566
    %1600 = vmatmul.f32.gmra.mxu0 %v1582
    %v1601 = vpop.f32.mrf.mxu0
    %v1602 = vadd.f32 0.0, %v1601
    %1603 = vdwg.mxu0
    %1604 = vmatpush.msra.mxu0 0.0
    %1605 = vmatpush.msra.mxu0 0.0
    %1606 = vmatpush.msra.mxu0 0.0
    %1607 = vmatpush.msra.mxu0 0.0
    %1608 = vmatpush.msra.mxu0 0.0
    %1609 = vmatpush.msra.mxu0 0.0
    %1610 = vmatpush.msra.mxu0 0.0
    %1611 = vmatpush.msra.mxu0 0.0
    %1612 = vmatpush.msra.mxu0 %v1581
    %1613 = vmatpush.msra.mxu0 %v1579
    %1614 = vmatpush.msra.mxu0 %v1577
    %1615 = vmatpush.msra.mxu0 %v1575
    %1616 = vmatpush.msra.mxu0 %v1573
    %1617 = vmatpush.msra.mxu0 %v1571
    %1618 = vmatpush.msra.mxu0 %v1569
    %1619 = vmatpush.msra.mxu0 %v1567
    %1620 = vmatmul.f32.gmra.mxu0 %v1582
    %v1621 = vpop.f32.mrf.mxu0
    %v1622 = vadd.f32 0.0, %v1621
    %1623 = vdwg.mxu0
    %1625 = vrot.lane.b32.xlu0 %v1557, 32
    %v1626 = vpop.permute.xlu0 %1625
    %v1627 = vsel %vm89, %v1626, 0
    %1629 = vmatpush.msra.mxu0 0.0
    %1630 = vmatpush.msra.mxu0 0.0
    %1631 = vmatpush.msra.mxu0 0.0
    %1632 = vmatpush.msra.mxu0 0.0
    %1633 = vmatpush.msra.mxu0 0.0
    %1634 = vmatpush.msra.mxu0 0.0
    %1635 = vmatpush.msra.mxu0 0.0
    %1636 = vmatpush.msra.mxu0 0.0
    %1637 = vmatpush.msra.mxu0 0.0
    %1638 = vmatpush.msra.mxu0 0.0
    %1639 = vmatpush.msra.mxu0 0.0
    %1640 = vmatpush.msra.mxu0 0.0
    %1641 = vmatpush.msra.mxu0 %v1564
    %1642 = vmatpush.msra.mxu0 %v1562
    %1643 = vmatpush.msra.mxu0 %v1560
    %1644 = vmatpush.msra.mxu0 %v1558
    %1645 = vmatmul.f32.gmra.mxu0 %v1627
    %v1646 = vpop.f32.mrf.mxu0
    %v1647 = vadd.f32 %v1602, %v1646
    %1648 = vdwg.mxu0
    %1649 = vmatpush.msra.mxu0 0.0
    %1650 = vmatpush.msra.mxu0 0.0
    %1651 = vmatpush.msra.mxu0 0.0
    %1652 = vmatpush.msra.mxu0 0.0
    %1653 = vmatpush.msra.mxu0 0.0
    %1654 = vmatpush.msra.mxu0 0.0
    %1655 = vmatpush.msra.mxu0 0.0
    %1656 = vmatpush.msra.mxu0 0.0
    %1657 = vmatpush.msra.mxu0 0.0
    %1658 = vmatpush.msra.mxu0 0.0
    %1659 = vmatpush.msra.mxu0 0.0
    %1660 = vmatpush.msra.mxu0 0.0
    %1661 = vmatpush.msra.mxu0 %v1565
    %1662 = vmatpush.msra.mxu0 %v1563
    %1663 = vmatpush.msra.mxu0 %v1561
    %1664 = vmatpush.msra.mxu0 %v1559
    %1665 = vmatmul.f32.gmra.mxu0 %v1627
    %v1666 = vpop.f32.mrf.mxu0
    %v1667 = vadd.f32 %v1622, %v1666
    %1668 = vdwg.mxu0
    %v1669 = vadd.f32 %v1647, %v201
    %v1670 = vadd.f32 %v1667, %v202
    %v1671 = vmul.f32 %v1669, 0.5
    %v1672 = vmul.f32 %v1670, 0.5
    %v1673 = vtanh.pop %v1671
    %v1674 = vtanh.pop %v1672
    %v1675 = vmul.f32 %v1673, 0.5
    %v1676 = vmul.f32 %v1674, 0.5
    %v1677 = vadd.f32 %v1675, 0.5
    %v1678 = vadd.f32 %v1676, 0.5
    %v1679 = vtanh.pop %v1670
    %v1680 = vmul.f32 %v1677, %v1500
    %v1681 = vmul.f32 %v1677, %v1679
    %1683 = vrot.lane.b32.xlu0 %v1681, 64
    %v1684 = vpop.permute.xlu0 %1683
    %v1686 = vadd.f32 %v1680, %v1684
    %v1687 = vtanh.pop %v1686
    %v1688 = vmul.f32 %v1678, %v1687
    %1690 = vrot.lane.b32.xlu0 %v1688, 64
    %v1691 = vpop.permute.xlu0 %1690
    %s1693 = scalar_lea.vmem [#allocation3], 56
    %1694 = vst.msk [vmem:[%s1693] sm:$0xff] %vm280, %v1691
    %v1695 = vld [vmem:[#allocation3] sm:$0xff]
    %v1696 = vld [vmem:[#allocation3 + $0x8] sm:$0xff]
    %v1697 = vld [vmem:[#allocation3 + $0x10] sm:$0xff]
    %v1698 = vld [vmem:[#allocation3 + $0x18] sm:$0xff]
    %v1699 = vld [vmem:[#allocation3 + $0x20] sm:$0xff]
    %v1700 = vld [vmem:[#allocation3 + $0x28] sm:$0xff]
    %v1701 = vld [vmem:[#allocation3 + $0x30] sm:$0xff]
    %v1702 = vld [vmem:[#allocation3 + $0x38] sm:$0xff]
    %v1703 = vld [vmem:[%s8] sm:$0xff]
    %v1704 = vld [vmem:[%s8 + $0x8] sm:$0xff]
    %v1705 = vld [vmem:[%s8 + $0x10] sm:$0xff]
    %v1706 = vld [vmem:[%s8 + $0x18] sm:$0xff]
    %v1707 = vld [vmem:[%s8 + $0x20] sm:$0xff]
    %v1708 = vld [vmem:[%s8 + $0x28] sm:$0xff]
    %v1709 = vld [vmem:[%s8 + $0x30] sm:$0xff]
    %v1710 = vld [vmem:[%s8 + $0x38] sm:$0xff]
    %v1711 = vld [vmem:[#allocation4] sm:$0x1]
    %v1713 = vperm.slane %v1711, 0
    %v1716 = vsel %vm280, %v1695, 0
    %v1719 = vsel %vm280, %v1696, 0
    %v1722 = vsel %vm280, %v1697, 0
    %v1725 = vsel %vm280, %v1698, 0
    %v1728 = vsel %vm280, %v1699, 0
    %v1731 = vsel %vm280, %v1700, 0
    %v1734 = vsel %vm280, %v1701, 0
    %v1737 = vsel %vm280, %v1702, 0
    %1739 = vmatpush.msra.mxu0 0.0
    %1740 = vmatpush.msra.mxu0 0.0
    %1741 = vmatpush.msra.mxu0 0.0
    %1742 = vmatpush.msra.mxu0 0.0
    %1743 = vmatpush.msra.mxu0 0.0
    %1744 = vmatpush.msra.mxu0 0.0
    %1745 = vmatpush.msra.mxu0 0.0
    %1746 = vmatpush.msra.mxu0 0.0
    %1747 = vmatpush.msra.mxu0 %v1710
    %1748 = vmatpush.msra.mxu0 %v1709
    %1749 = vmatpush.msra.mxu0 %v1708
    %1750 = vmatpush.msra.mxu0 %v1707
    %1751 = vmatpush.msra.mxu0 %v1706
    %1752 = vmatpush.msra.mxu0 %v1705
    %1753 = vmatpush.msra.mxu0 %v1704
    %1754 = vmatpush.msra.mxu0 %v1703
    %1755 = vmatmul.f32.gmra.mxu0 %v1716
    %v1756 = vpop.f32.mrf.mxu0
    %v1757 = vadd.f32 %v1713, %v1756
    %1758 = vmatmul.f32.gmra.mxu0 %v1719
    %v1759 = vpop.f32.mrf.mxu0
    %v1760 = vadd.f32 %v1713, %v1759
    %1761 = vmatmul.f32.gmra.mxu0 %v1722
    %v1762 = vpop.f32.mrf.mxu0
    %v1763 = vadd.f32 %v1713, %v1762
    %1764 = vmatmul.f32.gmra.mxu0 %v1725
    %v1765 = vpop.f32.mrf.mxu0
    %v1766 = vadd.f32 %v1713, %v1765
    %1767 = vmatmul.f32.gmra.mxu0 %v1728
    %v1768 = vpop.f32.mrf.mxu0
    %v1769 = vadd.f32 %v1713, %v1768
    %1770 = vmatmul.f32.gmra.mxu0 %v1731
    %v1771 = vpop.f32.mrf.mxu0
    %v1772 = vadd.f32 %v1713, %v1771
    %1773 = vmatmul.f32.gmra.mxu0 %v1734
    %v1774 = vpop.f32.mrf.mxu0
    %v1775 = vadd.f32 %v1713, %v1774
    %1776 = vmatmul.f32.gmra.mxu0 %v1737
    %v1777 = vpop.f32.mrf.mxu0
    %v1778 = vadd.f32 %v1713, %v1777
    %1779 = vdwg.mxu0
    %vm1780 = vcmask 7168
    %1781 = vst.msk [vmem:[%s10] sm:$0xff] %vm1780, %v1757
    %1782 = vst.msk [vmem:[%s10 + $0x8] sm:$0xff] %vm1780, %v1760
    %1783 = vst.msk [vmem:[%s10 + $0x10] sm:$0xff] %vm1780, %v1763
    %1784 = vst.msk [vmem:[%s10 + $0x18] sm:$0xff] %vm1780, %v1766
    %1785 = vst.msk [vmem:[%s10 + $0x20] sm:$0xff] %vm1780, %v1769
    %1786 = vst.msk [vmem:[%s10 + $0x28] sm:$0xff] %vm1780, %v1772
    %1787 = vst.msk [vmem:[%s10 + $0x30] sm:$0xff] %vm1780, %v1775
    %1788 = vst.msk [vmem:[%s10 + $0x38] sm:$0xff] %vm1780, %v1778
    // Predicated region
    $region54: #{decoder_forward.1} parent=1 // pred_check
      _
    $region55: #{decoder_forward.1} parent=1 // pred_check_branch
      %1790 = sbr.rel (0) target = $region57
    $region56: #{decoder_forward.1} parent=1 // pred_region
      _
    $region57: #{decoder_forward.1} parent=1 // pred_fallthru
      _
    // Predicated region
    $region58: #{decoder_forward.1} parent=1 // pred_check
      _
    $region59: #{decoder_forward.1} parent=1 // pred_check_branch
      %1792 = sbr.rel (0) target = $region61
    $region60: #{decoder_forward.1} parent=1 // pred_region
      _
    $region61: #{decoder_forward.1} parent=1 // pred_fallthru
      _
    %1793 = vsyncpa [#allocation6], 1
    %1794 = vsyncpa [#allocation8], 1

</llo_original>
